<compile_context>
chip_gen: v5e
topology: v5e:2x2
jax: 0.10.0
libtpu: 0.0.40
codegen_flags: <defaults>
</compile_context>

<pallas_src>
import functools

import numpy as np
import jax
import jax.numpy as jnp
from jax.experimental import pallas as pl
from jax.experimental.pallas import tpu as pltpu

_LANE = 128


def _round_up(x, m):
    return (x + m - 1) // m * m


def _pad_to(a, shape):
    pads = [(0, t - s) for s, t in zip(a.shape, shape)]
    return jnp.pad(a, pads)


# --------------------------------------------------------------------------
# Kernel: one batch tile of the full N-BEATS forward, all blocks unrolled.
# --------------------------------------------------------------------------
def _nbeats_kernel(x_ref,
                   w1_ref, b1_ref, w2_ref, b2_ref, w3_ref, b3_ref, w4_ref, b4_ref,
                   wt_ref, bt_ref,
                   out_ref,
                   *, n_blocks, feat_pad):
    res = x_ref[...].astype(jnp.float32)                  # (TILE_B, F) lane dense
    fc = jnp.zeros((res.shape[0], feat_pad), jnp.float32)

    # Static unroll over the N-BEATS blocks; all stacked weights are resident
    # in VMEM for the whole call (constant-index BlockSpecs).
    for k in range(n_blocks):
        h = jnp.maximum(
            jnp.dot(res, w1_ref[k], preferred_element_type=jnp.float32) + b1_ref[k], 0.0)
        h = jnp.maximum(
            jnp.dot(h, w2_ref[k], preferred_element_type=jnp.float32) + b2_ref[k], 0.0)
        h = jnp.maximum(
            jnp.dot(h, w3_ref[k], preferred_element_type=jnp.float32) + b3_ref[k], 0.0)
        h = jnp.maximum(
            jnp.dot(h, w4_ref[k], preferred_element_type=jnp.float32) + b4_ref[k], 0.0)

        # Fused theta head: [theta_b | theta_f], each half 128-lane aligned, so
        # the slices below are tile-aligned views (no XLU lane shifts).
        # stack_type ('generic'/'trend'/'seasonality') is mathematically
        # identical in the reference module, so no per-type branch is needed.
        theta = jnp.dot(h, wt_ref[k], preferred_element_type=jnp.float32) + bt_ref[k]

        res = res - theta[:, :feat_pad]       # backcast (zero in padded lanes)
        fc = fc + theta[:, feat_pad:]         # forecast accumulated at full width

    out_ref[...] = fc.astype(out_ref.dtype)   # lane-dense, unmasked store


# --------------------------------------------------------------------------
# One-time parameter preparation (hoisted off the per-call forward path):
# zero-pad feature dims to 128 lanes and fuse the two theta heads.
# --------------------------------------------------------------------------
def prepare_params(params, *, input_size, prediction_length):
    n_blocks, in_dim, hidden = params["w1"].shape
    theta_size = params["wb"].shape[-1]
    if in_dim != input_size:
        raise ValueError(f"params built for input_size={in_dim}, got {input_size}")
    if theta_size != input_size:
        # The PyTorch module's `residuals - backcast` only broadcasts when
        # theta_size == input_size (i.e. prediction_length <= input_size).
        raise ValueError(
            "NBEATS residual update requires theta_size == input_size; got "
            f"theta_size={theta_size}, input_size={input_size}")
    if prediction_length > theta_size:
        raise ValueError("prediction_length must be <= theta_size")

    F = _round_up(max(input_size, theta_size), _LANE)   # padded feature/theta width
    H = _round_up(hidden, _LANE)                        # padded hidden width

    def pad_w(w, r, c):
        return _pad_to(w, (n_blocks, r, c)).astype(jnp.float32)

    def pad_b(b, c):
        return _pad_to(b, (n_blocks, 1, c)).astype(jnp.float32)

    wb, bb = pad_w(params["wb"], H, F), pad_b(params["bb"], F)
    wf, bf = pad_w(params["wf"], H, F), pad_b(params["bf"], F)

    return dict(
        w1=pad_w(params["w1"], F, H), b1=pad_b(params["b1"], H),
        w2=pad_w(params["w2"], H, H), b2=pad_b(params["b2"], H),
        w3=pad_w(params["w3"], H, H), b3=pad_b(params["b3"], H),
        w4=pad_w(params["w4"], H, H), b4=pad_b(params["b4"], H),
        wt=jnp.concatenate([wb, wf], axis=-1),   # (nb, H, 2F): halves 128-aligned
        bt=jnp.concatenate([bb, bf], axis=-1),   # (nb, 1, 2F)
        feat_pad=F, hidden_pad=H, n_blocks=n_blocks,
        input_size=input_size, prediction_length=prediction_length,
    )


# --------------------------------------------------------------------------
# Forward wrapper: batch grid, constant-index resident weights.
# --------------------------------------------------------------------------
def nbeats_forward(x, prepared, *, tile_b=256):
    B, input_size = x.shape
    if input_size != prepared["input_size"]:
        raise ValueError("input width mismatch with prepared params")
    F = prepared["feat_pad"]
    H = prepared["hidden_pad"]
    n_blocks = prepared["n_blocks"]
    prediction_length = prepared["prediction_length"]

    # Batch tile: multiple of 8 sublanes; pad B up so the grid divides evenly.
    TILE_B = max(8, min(_round_up(tile_b, 8), _round_up(B, 8)))
    B_pad = _round_up(B, TILE_B)
    grid = (B_pad // TILE_B,)

    x_pad = _pad_to(x.astype(jnp.float32), (B_pad, F))

    weight_names = ("w1", "b1", "w2", "b2", "w3", "b3", "w4", "b4", "wt", "bt")
    weights = [prepared[n] for n in weight_names]

    def const_spec(arr):
        nd = arr.ndim
        # Constant block index across the whole grid: weights stay resident.
        return pl.BlockSpec(arr.shape, lambda i, _nd=nd: (0,) * _nd)

    in_specs = ([pl.BlockSpec((TILE_B, F), lambda i: (i, 0))]
                + [const_spec(w) for w in weights])
    out_spec = pl.BlockSpec((TILE_B, F), lambda i: (i, 0))

    # VMEM budget: 2x resident weights (conservative double-buffer bound) +
    # double-buffered in/out tiles + headroom.  Well under every chip's limit.
    resident_bytes = sum(int(np.prod(w.shape)) * w.dtype.itemsize for w in weights)
    tile_bytes = TILE_B * F * 4
    vmem_limit = int(2 * resident_bytes + 4 * tile_bytes + (8 << 20))

    flops = 2 * B_pad * n_blocks * (F * H + 3 * H * H + H * 2 * F)
    bytes_accessed = int(x_pad.size * 4 + B_pad * F * 4 + resident_bytes)

    kernel = functools.partial(_nbeats_kernel, n_blocks=n_blocks, feat_pad=F)

    out_pad = pl.pallas_call(
        kernel,
        out_shape=jax.ShapeDtypeStruct((B_pad, F), jnp.float32),
        grid=grid,
        in_specs=in_specs,
        out_specs=out_spec,
        compiler_params=pltpu.CompilerParams(
            dimension_semantics=("parallel",),      # megacore-shardable on v7x
            vmem_limit_bytes=vmem_limit,
        ),
        cost_estimate=pl.CostEstimate(
            flops=flops, transcendentals=0, bytes_accessed=bytes_accessed),
    )(x_pad, *weights)

    # Padded-lane / padded-batch trim: free wrapper-side slice.
    return out_pad[:B, :prediction_length]


# --------------------------------------------------------------------------
# Synthetic parameters and pure-JAX reference (for validation).
# --------------------------------------------------------------------------
def make_params(key, n_blocks, input_size, hidden_size, theta_size):
    """Deterministic synthetic init mimicking nn.Linear's U(-1/sqrt(fan_in), ...)."""
    def lin(k, fan_in, fan_out):
        kw, kb = jax.random.split(k)
        bound = 1.0 / np.sqrt(fan_in)
        w = jax.random.uniform(kw, (n_blocks, fan_in, fan_out), jnp.float32,
                               -bound, bound)
        b = jax.random.uniform(kb, (n_blocks, 1, fan_out), jnp.float32,
                               -bound, bound)
        return w, b

    keys = jax.random.split(key, 6)
    w1, b1 = lin(keys[0], input_size, hidden_size)
    w2, b2 = lin(keys[1], hidden_size, hidden_size)
    w3, b3 = lin(keys[2], hidden_size, hidden_size)
    w4, b4 = lin(keys[3], hidden_size, hidden_size)
    wb, bb = lin(keys[4], hidden_size, theta_size)
    wf, bf = lin(keys[5], hidden_size, theta_size)
    return dict(w1=w1, b1=b1, w2=w2, b2=b2, w3=w3, b3=b3, w4=w4, b4=b4,
                wb=wb, bb=bb, wf=wf, bf=bf)


def nbeats_reference(x, params, prediction_length):
    residuals = x.astype(jnp.float32)
    forecast = jnp.zeros((x.shape[0], prediction_length), jnp.float32)
    n_blocks = params["w1"].shape[0]
    for k in range(n_blocks):
        h = jax.nn.relu(residuals @ params["w1"][k] + params["b1"][k])
        h = jax.nn.relu(h @ params["w2"][k] + params["b2"][k])
        h = jax.nn.relu(h @ params["w3"][k] + params["b3"][k])
        h = jax.nn.relu(h @ params["w4"][k] + params["b4"][k])
        theta_b = h @ params["wb"][k] + params["bb"][k]
        theta_f = h @ params["wf"][k] + params["bf"][k]
        residuals = residuals - theta_b
        forecast = forecast + theta_f[:, :prediction_length]
    return forecast


if __name__ == "__main__":
    batch = 8
    input_size = 16
    prediction_length = 8            # must be <= input_size (PyTorch semantics)
    hidden_size = 32
    stacks = 2
    blocks_per_stack = 3
    n_blocks = stacks * blocks_per_stack
    theta_size = max(input_size, prediction_length)

    key = jax.random.PRNGKey(0)
    kx, kp = jax.random.split(key)
    x = jax.random.normal(kx, (batch, input_size), jnp.float32)
    params = make_params(kp, n_blocks, input_size, hidden_size, theta_size)

    # One-time parameter preparation (padding + head fusion), hoisted off the
    # per-call forward path.
    prepared = prepare_params(params, input_size=input_size,
                              prediction_length=prediction_length)

    out = nbeats_forward(x, prepared)
    out = jax.block_until_ready(out)

    ref = nbeats_reference(x, params, prediction_length)
    np.testing.assert_allclose(np.asarray(out), np.asarray(ref),
                               rtol=1e-4, atol=1e-4)
    print("KERNEL_OK")
</pallas_src>

<mosaic_0001>
module attributes {stable_mosaic.version = 11 : i64} {
  func.func @_nbeats_kernel(%arg0: i32, %arg1: memref<8x128xf32, #tpu.memory_space<vmem>>, %arg2: memref<6x128x128xf32, #tpu.memory_space<vmem>>, %arg3: memref<6x1x128xf32, #tpu.memory_space<vmem>>, %arg4: memref<6x128x128xf32, #tpu.memory_space<vmem>>, %arg5: memref<6x1x128xf32, #tpu.memory_space<vmem>>, %arg6: memref<6x128x128xf32, #tpu.memory_space<vmem>>, %arg7: memref<6x1x128xf32, #tpu.memory_space<vmem>>, %arg8: memref<6x128x128xf32, #tpu.memory_space<vmem>>, %arg9: memref<6x1x128xf32, #tpu.memory_space<vmem>>, %arg10: memref<6x128x256xf32, #tpu.memory_space<vmem>>, %arg11: memref<6x1x256xf32, #tpu.memory_space<vmem>>, %arg12: memref<8x128xf32, #tpu.memory_space<vmem>>) attributes {dimension_semantics = [#tpu.dimension_semantics<parallel>], iteration_bounds = array<i64: 1>, scalar_prefetch = 0 : i64, scratch_operands = 0 : i64, tpu.core_type = #tpu.core_type<tc>, window_params = [{transform_indices = @transform_0, window_bounds = array<i64: 8, 128>}, {pipeline_mode = #tpu.pipeline_mode<synchronous>, transform_indices = @transform_1, window_bounds = array<i64: 6, 128, 128>}, {pipeline_mode = #tpu.pipeline_mode<synchronous>, transform_indices = @transform_2, window_bounds = array<i64: 6, 1, 128>}, {pipeline_mode = #tpu.pipeline_mode<synchronous>, transform_indices = @transform_3, window_bounds = array<i64: 6, 128, 128>}, {pipeline_mode = #tpu.pipeline_mode<synchronous>, transform_indices = @transform_4, window_bounds = array<i64: 6, 1, 128>}, {pipeline_mode = #tpu.pipeline_mode<synchronous>, transform_indices = @transform_5, window_bounds = array<i64: 6, 128, 128>}, {pipeline_mode = #tpu.pipeline_mode<synchronous>, transform_indices = @transform_6, window_bounds = array<i64: 6, 1, 128>}, {pipeline_mode = #tpu.pipeline_mode<synchronous>, transform_indices = @transform_7, window_bounds = array<i64: 6, 128, 128>}, {pipeline_mode = #tpu.pipeline_mode<synchronous>, transform_indices = @transform_8, window_bounds = array<i64: 6, 1, 128>}, {pipeline_mode = #tpu.pipeline_mode<synchronous>, transform_indices = @transform_9, window_bounds = array<i64: 6, 128, 256>}, {pipeline_mode = #tpu.pipeline_mode<synchronous>, transform_indices = @transform_10, window_bounds = array<i64: 6, 1, 256>}, {transform_indices = @transform_11, window_bounds = array<i64: 8, 128>}]} {
    %c0 = arith.constant 0 : index
    %c0_0 = arith.constant 0 : index
    %0 = vector.load %arg1[%c0, %c0_0] : memref<8x128xf32, #tpu.memory_space<vmem>>, vector<8x128xf32>
    %cst = arith.constant 0.000000e+00 : f32
    %1 = vector.broadcast %cst : f32 to vector<8x128xf32>
    %c0_1 = arith.constant 0 : index
    %c0_2 = arith.constant 0 : index
    %c0_3 = arith.constant 0 : index
    %2 = vector.load %arg2[%c0_1, %c0_2, %c0_3] : memref<6x128x128xf32, #tpu.memory_space<vmem>>, vector<1x128x128xf32>
    %3 = vector.shape_cast %2 : vector<1x128x128xf32> to vector<128x128xf32>
    %cst_4 = arith.constant dense<0.000000e+00> : vector<8x128xf32>
    %4 = tpu.matmul %0, %3, %cst_4 {dimension_numbers = #tpu.dot_dimension_numbers<[1], [0], [0], [1], [0, 0, 1, 1], [], []>} : vector<8x128xf32>, vector<128x128xf32>, vector<8x128xf32> -> vector<8x128xf32>
    %c0_5 = arith.constant 0 : index
    %c0_6 = arith.constant 0 : index
    %c0_7 = arith.constant 0 : index
    %5 = vector.load %arg3[%c0_5, %c0_6, %c0_7] : memref<6x1x128xf32, #tpu.memory_space<vmem>>, vector<1x1x128xf32>
    %6 = vector.shape_cast %5 : vector<1x1x128xf32> to vector<1x128xf32>
    %7 = vector.broadcast %6 : vector<1x128xf32> to vector<8x128xf32>
    %8 = arith.addf %4, %7 : vector<8x128xf32>
    %cst_8 = arith.constant 0.000000e+00 : f32
    %9 = vector.broadcast %cst_8 : f32 to vector<8x128xf32>
    %10 = arith.maximumf %8, %9 : vector<8x128xf32>
    %c0_9 = arith.constant 0 : index
    %c0_10 = arith.constant 0 : index
    %c0_11 = arith.constant 0 : index
    %11 = vector.load %arg4[%c0_9, %c0_10, %c0_11] : memref<6x128x128xf32, #tpu.memory_space<vmem>>, vector<1x128x128xf32>
    %12 = vector.shape_cast %11 : vector<1x128x128xf32> to vector<128x128xf32>
    %cst_12 = arith.constant dense<0.000000e+00> : vector<8x128xf32>
    %13 = tpu.matmul %10, %12, %cst_12 {dimension_numbers = #tpu.dot_dimension_numbers<[1], [0], [0], [1], [0, 0, 1, 1], [], []>} : vector<8x128xf32>, vector<128x128xf32>, vector<8x128xf32> -> vector<8x128xf32>
    %c0_13 = arith.constant 0 : index
    %c0_14 = arith.constant 0 : index
    %c0_15 = arith.constant 0 : index
    %14 = vector.load %arg5[%c0_13, %c0_14, %c0_15] : memref<6x1x128xf32, #tpu.memory_space<vmem>>, vector<1x1x128xf32>
    %15 = vector.shape_cast %14 : vector<1x1x128xf32> to vector<1x128xf32>
    %16 = vector.broadcast %15 : vector<1x128xf32> to vector<8x128xf32>
    %17 = arith.addf %13, %16 : vector<8x128xf32>
    %cst_16 = arith.constant 0.000000e+00 : f32
    %18 = vector.broadcast %cst_16 : f32 to vector<8x128xf32>
    %19 = arith.maximumf %17, %18 : vector<8x128xf32>
    %c0_17 = arith.constant 0 : index
    %c0_18 = arith.constant 0 : index
    %c0_19 = arith.constant 0 : index
    %20 = vector.load %arg6[%c0_17, %c0_18, %c0_19] : memref<6x128x128xf32, #tpu.memory_space<vmem>>, vector<1x128x128xf32>
    %21 = vector.shape_cast %20 : vector<1x128x128xf32> to vector<128x128xf32>
    %cst_20 = arith.constant dense<0.000000e+00> : vector<8x128xf32>
    %22 = tpu.matmul %19, %21, %cst_20 {dimension_numbers = #tpu.dot_dimension_numbers<[1], [0], [0], [1], [0, 0, 1, 1], [], []>} : vector<8x128xf32>, vector<128x128xf32>, vector<8x128xf32> -> vector<8x128xf32>
    %c0_21 = arith.constant 0 : index
    %c0_22 = arith.constant 0 : index
    %c0_23 = arith.constant 0 : index
    %23 = vector.load %arg7[%c0_21, %c0_22, %c0_23] : memref<6x1x128xf32, #tpu.memory_space<vmem>>, vector<1x1x128xf32>
    %24 = vector.shape_cast %23 : vector<1x1x128xf32> to vector<1x128xf32>
    %25 = vector.broadcast %24 : vector<1x128xf32> to vector<8x128xf32>
    %26 = arith.addf %22, %25 : vector<8x128xf32>
    %cst_24 = arith.constant 0.000000e+00 : f32
    %27 = vector.broadcast %cst_24 : f32 to vector<8x128xf32>
    %28 = arith.maximumf %26, %27 : vector<8x128xf32>
    %c0_25 = arith.constant 0 : index
    %c0_26 = arith.constant 0 : index
    %c0_27 = arith.constant 0 : index
    %29 = vector.load %arg8[%c0_25, %c0_26, %c0_27] : memref<6x128x128xf32, #tpu.memory_space<vmem>>, vector<1x128x128xf32>
    %30 = vector.shape_cast %29 : vector<1x128x128xf32> to vector<128x128xf32>
    %cst_28 = arith.constant dense<0.000000e+00> : vector<8x128xf32>
    %31 = tpu.matmul %28, %30, %cst_28 {dimension_numbers = #tpu.dot_dimension_numbers<[1], [0], [0], [1], [0, 0, 1, 1], [], []>} : vector<8x128xf32>, vector<128x128xf32>, vector<8x128xf32> -> vector<8x128xf32>
    %c0_29 = arith.constant 0 : index
    %c0_30 = arith.constant 0 : index
    %c0_31 = arith.constant 0 : index
    %32 = vector.load %arg9[%c0_29, %c0_30, %c0_31] : memref<6x1x128xf32, #tpu.memory_space<vmem>>, vector<1x1x128xf32>
    %33 = vector.shape_cast %32 : vector<1x1x128xf32> to vector<1x128xf32>
    %34 = vector.broadcast %33 : vector<1x128xf32> to vector<8x128xf32>
    %35 = arith.addf %31, %34 : vector<8x128xf32>
    %cst_32 = arith.constant 0.000000e+00 : f32
    %36 = vector.broadcast %cst_32 : f32 to vector<8x128xf32>
    %37 = arith.maximumf %35, %36 : vector<8x128xf32>
    %c0_33 = arith.constant 0 : index
    %c0_34 = arith.constant 0 : index
    %c0_35 = arith.constant 0 : index
    %38 = vector.load %arg10[%c0_33, %c0_34, %c0_35] : memref<6x128x256xf32, #tpu.memory_space<vmem>>, vector<1x128x256xf32>
    %39 = vector.shape_cast %38 : vector<1x128x256xf32> to vector<128x256xf32>
    %cst_36 = arith.constant dense<0.000000e+00> : vector<8x256xf32>
    %40 = tpu.matmul %37, %39, %cst_36 {dimension_numbers = #tpu.dot_dimension_numbers<[1], [0], [0], [1], [0, 0, 1, 1], [], []>} : vector<8x128xf32>, vector<128x256xf32>, vector<8x256xf32> -> vector<8x256xf32>
    %c0_37 = arith.constant 0 : index
    %c0_38 = arith.constant 0 : index
    %c0_39 = arith.constant 0 : index
    %41 = vector.load %arg11[%c0_37, %c0_38, %c0_39] : memref<6x1x256xf32, #tpu.memory_space<vmem>>, vector<1x1x256xf32>
    %42 = vector.shape_cast %41 : vector<1x1x256xf32> to vector<1x256xf32>
    %43 = vector.broadcast %42 : vector<1x256xf32> to vector<8x256xf32>
    %44 = arith.addf %40, %43 : vector<8x256xf32>
    %45 = vector.extract_strided_slice %44 {offsets = [0, 0], sizes = [8, 128], strides = [1, 1]} : vector<8x256xf32> to vector<8x128xf32>
    %46 = arith.subf %0, %45 : vector<8x128xf32>
    %47 = vector.extract_strided_slice %44 {offsets = [0, 128], sizes = [8, 128], strides = [1, 1]} : vector<8x256xf32> to vector<8x128xf32>
    %48 = arith.addf %1, %47 : vector<8x128xf32>
    %c1 = arith.constant 1 : index
    %c0_40 = arith.constant 0 : index
    %c0_41 = arith.constant 0 : index
    %49 = vector.load %arg2[%c1, %c0_40, %c0_41] : memref<6x128x128xf32, #tpu.memory_space<vmem>>, vector<1x128x128xf32>
    %50 = vector.shape_cast %49 : vector<1x128x128xf32> to vector<128x128xf32>
    %cst_42 = arith.constant dense<0.000000e+00> : vector<8x128xf32>
    %51 = tpu.matmul %46, %50, %cst_42 {dimension_numbers = #tpu.dot_dimension_numbers<[1], [0], [0], [1], [0, 0, 1, 1], [], []>} : vector<8x128xf32>, vector<128x128xf32>, vector<8x128xf32> -> vector<8x128xf32>
    %c1_43 = arith.constant 1 : index
    %c0_44 = arith.constant 0 : index
    %c0_45 = arith.constant 0 : index
    %52 = vector.load %arg3[%c1_43, %c0_44, %c0_45] : memref<6x1x128xf32, #tpu.memory_space<vmem>>, vector<1x1x128xf32>
    %53 = vector.shape_cast %52 : vector<1x1x128xf32> to vector<1x128xf32>
    %54 = vector.broadcast %53 : vector<1x128xf32> to vector<8x128xf32>
    %55 = arith.addf %51, %54 : vector<8x128xf32>
    %cst_46 = arith.constant 0.000000e+00 : f32
    %56 = vector.broadcast %cst_46 : f32 to vector<8x128xf32>
    %57 = arith.maximumf %55, %56 : vector<8x128xf32>
    %c1_47 = arith.constant 1 : index
    %c0_48 = arith.constant 0 : index
    %c0_49 = arith.constant 0 : index
    %58 = vector.load %arg4[%c1_47, %c0_48, %c0_49] : memref<6x128x128xf32, #tpu.memory_space<vmem>>, vector<1x128x128xf32>
    %59 = vector.shape_cast %58 : vector<1x128x128xf32> to vector<128x128xf32>
    %cst_50 = arith.constant dense<0.000000e+00> : vector<8x128xf32>
    %60 = tpu.matmul %57, %59, %cst_50 {dimension_numbers = #tpu.dot_dimension_numbers<[1], [0], [0], [1], [0, 0, 1, 1], [], []>} : vector<8x128xf32>, vector<128x128xf32>, vector<8x128xf32> -> vector<8x128xf32>
    %c1_51 = arith.constant 1 : index
    %c0_52 = arith.constant 0 : index
    %c0_53 = arith.constant 0 : index
    %61 = vector.load %arg5[%c1_51, %c0_52, %c0_53] : memref<6x1x128xf32, #tpu.memory_space<vmem>>, vector<1x1x128xf32>
    %62 = vector.shape_cast %61 : vector<1x1x128xf32> to vector<1x128xf32>
    %63 = vector.broadcast %62 : vector<1x128xf32> to vector<8x128xf32>
    %64 = arith.addf %60, %63 : vector<8x128xf32>
    %cst_54 = arith.constant 0.000000e+00 : f32
    %65 = vector.broadcast %cst_54 : f32 to vector<8x128xf32>
    %66 = arith.maximumf %64, %65 : vector<8x128xf32>
    %c1_55 = arith.constant 1 : index
    %c0_56 = arith.constant 0 : index
    %c0_57 = arith.constant 0 : index
    %67 = vector.load %arg6[%c1_55, %c0_56, %c0_57] : memref<6x128x128xf32, #tpu.memory_space<vmem>>, vector<1x128x128xf32>
    %68 = vector.shape_cast %67 : vector<1x128x128xf32> to vector<128x128xf32>
    %cst_58 = arith.constant dense<0.000000e+00> : vector<8x128xf32>
    %69 = tpu.matmul %66, %68, %cst_58 {dimension_numbers = #tpu.dot_dimension_numbers<[1], [0], [0], [1], [0, 0, 1, 1], [], []>} : vector<8x128xf32>, vector<128x128xf32>, vector<8x128xf32> -> vector<8x128xf32>
    %c1_59 = arith.constant 1 : index
    %c0_60 = arith.constant 0 : index
    %c0_61 = arith.constant 0 : index
    %70 = vector.load %arg7[%c1_59, %c0_60, %c0_61] : memref<6x1x128xf32, #tpu.memory_space<vmem>>, vector<1x1x128xf32>
    %71 = vector.shape_cast %70 : vector<1x1x128xf32> to vector<1x128xf32>
    %72 = vector.broadcast %71 : vector<1x128xf32> to vector<8x128xf32>
    %73 = arith.addf %69, %72 : vector<8x128xf32>
    %cst_62 = arith.constant 0.000000e+00 : f32
    %74 = vector.broadcast %cst_62 : f32 to vector<8x128xf32>
    %75 = arith.maximumf %73, %74 : vector<8x128xf32>
    %c1_63 = arith.constant 1 : index
    %c0_64 = arith.constant 0 : index
    %c0_65 = arith.constant 0 : index
    %76 = vector.load %arg8[%c1_63, %c0_64, %c0_65] : memref<6x128x128xf32, #tpu.memory_space<vmem>>, vector<1x128x128xf32>
    %77 = vector.shape_cast %76 : vector<1x128x128xf32> to vector<128x128xf32>
    %cst_66 = arith.constant dense<0.000000e+00> : vector<8x128xf32>
    %78 = tpu.matmul %75, %77, %cst_66 {dimension_numbers = #tpu.dot_dimension_numbers<[1], [0], [0], [1], [0, 0, 1, 1], [], []>} : vector<8x128xf32>, vector<128x128xf32>, vector<8x128xf32> -> vector<8x128xf32>
    %c1_67 = arith.constant 1 : index
    %c0_68 = arith.constant 0 : index
    %c0_69 = arith.constant 0 : index
    %79 = vector.load %arg9[%c1_67, %c0_68, %c0_69] : memref<6x1x128xf32, #tpu.memory_space<vmem>>, vector<1x1x128xf32>
    %80 = vector.shape_cast %79 : vector<1x1x128xf32> to vector<1x128xf32>
    %81 = vector.broadcast %80 : vector<1x128xf32> to vector<8x128xf32>
    %82 = arith.addf %78, %81 : vector<8x128xf32>
    %cst_70 = arith.constant 0.000000e+00 : f32
    %83 = vector.broadcast %cst_70 : f32 to vector<8x128xf32>
    %84 = arith.maximumf %82, %83 : vector<8x128xf32>
    %c1_71 = arith.constant 1 : index
    %c0_72 = arith.constant 0 : index
    %c0_73 = arith.constant 0 : index
    %85 = vector.load %arg10[%c1_71, %c0_72, %c0_73] : memref<6x128x256xf32, #tpu.memory_space<vmem>>, vector<1x128x256xf32>
    %86 = vector.shape_cast %85 : vector<1x128x256xf32> to vector<128x256xf32>
    %cst_74 = arith.constant dense<0.000000e+00> : vector<8x256xf32>
    %87 = tpu.matmul %84, %86, %cst_74 {dimension_numbers = #tpu.dot_dimension_numbers<[1], [0], [0], [1], [0, 0, 1, 1], [], []>} : vector<8x128xf32>, vector<128x256xf32>, vector<8x256xf32> -> vector<8x256xf32>
    %c1_75 = arith.constant 1 : index
    %c0_76 = arith.constant 0 : index
    %c0_77 = arith.constant 0 : index
    %88 = vector.load %arg11[%c1_75, %c0_76, %c0_77] : memref<6x1x256xf32, #tpu.memory_space<vmem>>, vector<1x1x256xf32>
    %89 = vector.shape_cast %88 : vector<1x1x256xf32> to vector<1x256xf32>
    %90 = vector.broadcast %89 : vector<1x256xf32> to vector<8x256xf32>
    %91 = arith.addf %87, %90 : vector<8x256xf32>
    %92 = vector.extract_strided_slice %91 {offsets = [0, 0], sizes = [8, 128], strides = [1, 1]} : vector<8x256xf32> to vector<8x128xf32>
    %93 = arith.subf %46, %92 : vector<8x128xf32>
    %94 = vector.extract_strided_slice %91 {offsets = [0, 128], sizes = [8, 128], strides = [1, 1]} : vector<8x256xf32> to vector<8x128xf32>
    %95 = arith.addf %48, %94 : vector<8x128xf32>
    %c2 = arith.constant 2 : index
    %c0_78 = arith.constant 0 : index
    %c0_79 = arith.constant 0 : index
    %96 = vector.load %arg2[%c2, %c0_78, %c0_79] : memref<6x128x128xf32, #tpu.memory_space<vmem>>, vector<1x128x128xf32>
    %97 = vector.shape_cast %96 : vector<1x128x128xf32> to vector<128x128xf32>
    %cst_80 = arith.constant dense<0.000000e+00> : vector<8x128xf32>
    %98 = tpu.matmul %93, %97, %cst_80 {dimension_numbers = #tpu.dot_dimension_numbers<[1], [0], [0], [1], [0, 0, 1, 1], [], []>} : vector<8x128xf32>, vector<128x128xf32>, vector<8x128xf32> -> vector<8x128xf32>
    %c2_81 = arith.constant 2 : index
    %c0_82 = arith.constant 0 : index
    %c0_83 = arith.constant 0 : index
    %99 = vector.load %arg3[%c2_81, %c0_82, %c0_83] : memref<6x1x128xf32, #tpu.memory_space<vmem>>, vector<1x1x128xf32>
    %100 = vector.shape_cast %99 : vector<1x1x128xf32> to vector<1x128xf32>
    %101 = vector.broadcast %100 : vector<1x128xf32> to vector<8x128xf32>
    %102 = arith.addf %98, %101 : vector<8x128xf32>
    %cst_84 = arith.constant 0.000000e+00 : f32
    %103 = vector.broadcast %cst_84 : f32 to vector<8x128xf32>
    %104 = arith.maximumf %102, %103 : vector<8x128xf32>
    %c2_85 = arith.constant 2 : index
    %c0_86 = arith.constant 0 : index
    %c0_87 = arith.constant 0 : index
    %105 = vector.load %arg4[%c2_85, %c0_86, %c0_87] : memref<6x128x128xf32, #tpu.memory_space<vmem>>, vector<1x128x128xf32>
    %106 = vector.shape_cast %105 : vector<1x128x128xf32> to vector<128x128xf32>
    %cst_88 = arith.constant dense<0.000000e+00> : vector<8x128xf32>
    %107 = tpu.matmul %104, %106, %cst_88 {dimension_numbers = #tpu.dot_dimension_numbers<[1], [0], [0], [1], [0, 0, 1, 1], [], []>} : vector<8x128xf32>, vector<128x128xf32>, vector<8x128xf32> -> vector<8x128xf32>
    %c2_89 = arith.constant 2 : index
    %c0_90 = arith.constant 0 : index
    %c0_91 = arith.constant 0 : index
    %108 = vector.load %arg5[%c2_89, %c0_90, %c0_91] : memref<6x1x128xf32, #tpu.memory_space<vmem>>, vector<1x1x128xf32>
    %109 = vector.shape_cast %108 : vector<1x1x128xf32> to vector<1x128xf32>
    %110 = vector.broadcast %109 : vector<1x128xf32> to vector<8x128xf32>
    %111 = arith.addf %107, %110 : vector<8x128xf32>
    %cst_92 = arith.constant 0.000000e+00 : f32
    %112 = vector.broadcast %cst_92 : f32 to vector<8x128xf32>
    %113 = arith.maximumf %111, %112 : vector<8x128xf32>
    %c2_93 = arith.constant 2 : index
    %c0_94 = arith.constant 0 : index
    %c0_95 = arith.constant 0 : index
    %114 = vector.load %arg6[%c2_93, %c0_94, %c0_95] : memref<6x128x128xf32, #tpu.memory_space<vmem>>, vector<1x128x128xf32>
    %115 = vector.shape_cast %114 : vector<1x128x128xf32> to vector<128x128xf32>
    %cst_96 = arith.constant dense<0.000000e+00> : vector<8x128xf32>
    %116 = tpu.matmul %113, %115, %cst_96 {dimension_numbers = #tpu.dot_dimension_numbers<[1], [0], [0], [1], [0, 0, 1, 1], [], []>} : vector<8x128xf32>, vector<128x128xf32>, vector<8x128xf32> -> vector<8x128xf32>
    %c2_97 = arith.constant 2 : index
    %c0_98 = arith.constant 0 : index
    %c0_99 = arith.constant 0 : index
    %117 = vector.load %arg7[%c2_97, %c0_98, %c0_99] : memref<6x1x128xf32, #tpu.memory_space<vmem>>, vector<1x1x128xf32>
    %118 = vector.shape_cast %117 : vector<1x1x128xf32> to vector<1x128xf32>
    %119 = vector.broadcast %118 : vector<1x128xf32> to vector<8x128xf32>
    %120 = arith.addf %116, %119 : vector<8x128xf32>
    %cst_100 = arith.constant 0.000000e+00 : f32
    %121 = vector.broadcast %cst_100 : f32 to vector<8x128xf32>
    %122 = arith.maximumf %120, %121 : vector<8x128xf32>
    %c2_101 = arith.constant 2 : index
    %c0_102 = arith.constant 0 : index
    %c0_103 = arith.constant 0 : index
    %123 = vector.load %arg8[%c2_101, %c0_102, %c0_103] : memref<6x128x128xf32, #tpu.memory_space<vmem>>, vector<1x128x128xf32>
    %124 = vector.shape_cast %123 : vector<1x128x128xf32> to vector<128x128xf32>
    %cst_104 = arith.constant dense<0.000000e+00> : vector<8x128xf32>
    %125 = tpu.matmul %122, %124, %cst_104 {dimension_numbers = #tpu.dot_dimension_numbers<[1], [0], [0], [1], [0, 0, 1, 1], [], []>} : vector<8x128xf32>, vector<128x128xf32>, vector<8x128xf32> -> vector<8x128xf32>
    %c2_105 = arith.constant 2 : index
    %c0_106 = arith.constant 0 : index
    %c0_107 = arith.constant 0 : index
    %126 = vector.load %arg9[%c2_105, %c0_106, %c0_107] : memref<6x1x128xf32, #tpu.memory_space<vmem>>, vector<1x1x128xf32>
    %127 = vector.shape_cast %126 : vector<1x1x128xf32> to vector<1x128xf32>
    %128 = vector.broadcast %127 : vector<1x128xf32> to vector<8x128xf32>
    %129 = arith.addf %125, %128 : vector<8x128xf32>
    %cst_108 = arith.constant 0.000000e+00 : f32
    %130 = vector.broadcast %cst_108 : f32 to vector<8x128xf32>
    %131 = arith.maximumf %129, %130 : vector<8x128xf32>
    %c2_109 = arith.constant 2 : index
    %c0_110 = arith.constant 0 : index
    %c0_111 = arith.constant 0 : index
    %132 = vector.load %arg10[%c2_109, %c0_110, %c0_111] : memref<6x128x256xf32, #tpu.memory_space<vmem>>, vector<1x128x256xf32>
    %133 = vector.shape_cast %132 : vector<1x128x256xf32> to vector<128x256xf32>
    %cst_112 = arith.constant dense<0.000000e+00> : vector<8x256xf32>
    %134 = tpu.matmul %131, %133, %cst_112 {dimension_numbers = #tpu.dot_dimension_numbers<[1], [0], [0], [1], [0, 0, 1, 1], [], []>} : vector<8x128xf32>, vector<128x256xf32>, vector<8x256xf32> -> vector<8x256xf32>
    %c2_113 = arith.constant 2 : index
    %c0_114 = arith.constant 0 : index
    %c0_115 = arith.constant 0 : index
    %135 = vector.load %arg11[%c2_113, %c0_114, %c0_115] : memref<6x1x256xf32, #tpu.memory_space<vmem>>, vector<1x1x256xf32>
    %136 = vector.shape_cast %135 : vector<1x1x256xf32> to vector<1x256xf32>
    %137 = vector.broadcast %136 : vector<1x256xf32> to vector<8x256xf32>
    %138 = arith.addf %134, %137 : vector<8x256xf32>
    %139 = vector.extract_strided_slice %138 {offsets = [0, 0], sizes = [8, 128], strides = [1, 1]} : vector<8x256xf32> to vector<8x128xf32>
    %140 = arith.subf %93, %139 : vector<8x128xf32>
    %141 = vector.extract_strided_slice %138 {offsets = [0, 128], sizes = [8, 128], strides = [1, 1]} : vector<8x256xf32> to vector<8x128xf32>
    %142 = arith.addf %95, %141 : vector<8x128xf32>
    %c3 = arith.constant 3 : index
    %c0_116 = arith.constant 0 : index
    %c0_117 = arith.constant 0 : index
    %143 = vector.load %arg2[%c3, %c0_116, %c0_117] : memref<6x128x128xf32, #tpu.memory_space<vmem>>, vector<1x128x128xf32>
    %144 = vector.shape_cast %143 : vector<1x128x128xf32> to vector<128x128xf32>
    %cst_118 = arith.constant dense<0.000000e+00> : vector<8x128xf32>
    %145 = tpu.matmul %140, %144, %cst_118 {dimension_numbers = #tpu.dot_dimension_numbers<[1], [0], [0], [1], [0, 0, 1, 1], [], []>} : vector<8x128xf32>, vector<128x128xf32>, vector<8x128xf32> -> vector<8x128xf32>
    %c3_119 = arith.constant 3 : index
    %c0_120 = arith.constant 0 : index
    %c0_121 = arith.constant 0 : index
    %146 = vector.load %arg3[%c3_119, %c0_120, %c0_121] : memref<6x1x128xf32, #tpu.memory_space<vmem>>, vector<1x1x128xf32>
    %147 = vector.shape_cast %146 : vector<1x1x128xf32> to vector<1x128xf32>
    %148 = vector.broadcast %147 : vector<1x128xf32> to vector<8x128xf32>
    %149 = arith.addf %145, %148 : vector<8x128xf32>
    %cst_122 = arith.constant 0.000000e+00 : f32
    %150 = vector.broadcast %cst_122 : f32 to vector<8x128xf32>
    %151 = arith.maximumf %149, %150 : vector<8x128xf32>
    %c3_123 = arith.constant 3 : index
    %c0_124 = arith.constant 0 : index
    %c0_125 = arith.constant 0 : index
    %152 = vector.load %arg4[%c3_123, %c0_124, %c0_125] : memref<6x128x128xf32, #tpu.memory_space<vmem>>, vector<1x128x128xf32>
    %153 = vector.shape_cast %152 : vector<1x128x128xf32> to vector<128x128xf32>
    %cst_126 = arith.constant dense<0.000000e+00> : vector<8x128xf32>
    %154 = tpu.matmul %151, %153, %cst_126 {dimension_numbers = #tpu.dot_dimension_numbers<[1], [0], [0], [1], [0, 0, 1, 1], [], []>} : vector<8x128xf32>, vector<128x128xf32>, vector<8x128xf32> -> vector<8x128xf32>
    %c3_127 = arith.constant 3 : index
    %c0_128 = arith.constant 0 : index
    %c0_129 = arith.constant 0 : index
    %155 = vector.load %arg5[%c3_127, %c0_128, %c0_129] : memref<6x1x128xf32, #tpu.memory_space<vmem>>, vector<1x1x128xf32>
    %156 = vector.shape_cast %155 : vector<1x1x128xf32> to vector<1x128xf32>
    %157 = vector.broadcast %156 : vector<1x128xf32> to vector<8x128xf32>
    %158 = arith.addf %154, %157 : vector<8x128xf32>
    %cst_130 = arith.constant 0.000000e+00 : f32
    %159 = vector.broadcast %cst_130 : f32 to vector<8x128xf32>
    %160 = arith.maximumf %158, %159 : vector<8x128xf32>
    %c3_131 = arith.constant 3 : index
    %c0_132 = arith.constant 0 : index
    %c0_133 = arith.constant 0 : index
    %161 = vector.load %arg6[%c3_131, %c0_132, %c0_133] : memref<6x128x128xf32, #tpu.memory_space<vmem>>, vector<1x128x128xf32>
    %162 = vector.shape_cast %161 : vector<1x128x128xf32> to vector<128x128xf32>
    %cst_134 = arith.constant dense<0.000000e+00> : vector<8x128xf32>
    %163 = tpu.matmul %160, %162, %cst_134 {dimension_numbers = #tpu.dot_dimension_numbers<[1], [0], [0], [1], [0, 0, 1, 1], [], []>} : vector<8x128xf32>, vector<128x128xf32>, vector<8x128xf32> -> vector<8x128xf32>
    %c3_135 = arith.constant 3 : index
    %c0_136 = arith.constant 0 : index
    %c0_137 = arith.constant 0 : index
    %164 = vector.load %arg7[%c3_135, %c0_136, %c0_137] : memref<6x1x128xf32, #tpu.memory_space<vmem>>, vector<1x1x128xf32>
    %165 = vector.shape_cast %164 : vector<1x1x128xf32> to vector<1x128xf32>
    %166 = vector.broadcast %165 : vector<1x128xf32> to vector<8x128xf32>
    %167 = arith.addf %163, %166 : vector<8x128xf32>
    %cst_138 = arith.constant 0.000000e+00 : f32
    %168 = vector.broadcast %cst_138 : f32 to vector<8x128xf32>
    %169 = arith.maximumf %167, %168 : vector<8x128xf32>
    %c3_139 = arith.constant 3 : index
    %c0_140 = arith.constant 0 : index
    %c0_141 = arith.constant 0 : index
    %170 = vector.load %arg8[%c3_139, %c0_140, %c0_141] : memref<6x128x128xf32, #tpu.memory_space<vmem>>, vector<1x128x128xf32>
    %171 = vector.shape_cast %170 : vector<1x128x128xf32> to vector<128x128xf32>
    %cst_142 = arith.constant dense<0.000000e+00> : vector<8x128xf32>
    %172 = tpu.matmul %169, %171, %cst_142 {dimension_numbers = #tpu.dot_dimension_numbers<[1], [0], [0], [1], [0, 0, 1, 1], [], []>} : vector<8x128xf32>, vector<128x128xf32>, vector<8x128xf32> -> vector<8x128xf32>
    %c3_143 = arith.constant 3 : index
    %c0_144 = arith.constant 0 : index
    %c0_145 = arith.constant 0 : index
    %173 = vector.load %arg9[%c3_143, %c0_144, %c0_145] : memref<6x1x128xf32, #tpu.memory_space<vmem>>, vector<1x1x128xf32>
    %174 = vector.shape_cast %173 : vector<1x1x128xf32> to vector<1x128xf32>
    %175 = vector.broadcast %174 : vector<1x128xf32> to vector<8x128xf32>
    %176 = arith.addf %172, %175 : vector<8x128xf32>
    %cst_146 = arith.constant 0.000000e+00 : f32
    %177 = vector.broadcast %cst_146 : f32 to vector<8x128xf32>
    %178 = arith.maximumf %176, %177 : vector<8x128xf32>
    %c3_147 = arith.constant 3 : index
    %c0_148 = arith.constant 0 : index
    %c0_149 = arith.constant 0 : index
    %179 = vector.load %arg10[%c3_147, %c0_148, %c0_149] : memref<6x128x256xf32, #tpu.memory_space<vmem>>, vector<1x128x256xf32>
    %180 = vector.shape_cast %179 : vector<1x128x256xf32> to vector<128x256xf32>
    %cst_150 = arith.constant dense<0.000000e+00> : vector<8x256xf32>
    %181 = tpu.matmul %178, %180, %cst_150 {dimension_numbers = #tpu.dot_dimension_numbers<[1], [0], [0], [1], [0, 0, 1, 1], [], []>} : vector<8x128xf32>, vector<128x256xf32>, vector<8x256xf32> -> vector<8x256xf32>
    %c3_151 = arith.constant 3 : index
    %c0_152 = arith.constant 0 : index
    %c0_153 = arith.constant 0 : index
    %182 = vector.load %arg11[%c3_151, %c0_152, %c0_153] : memref<6x1x256xf32, #tpu.memory_space<vmem>>, vector<1x1x256xf32>
    %183 = vector.shape_cast %182 : vector<1x1x256xf32> to vector<1x256xf32>
    %184 = vector.broadcast %183 : vector<1x256xf32> to vector<8x256xf32>
    %185 = arith.addf %181, %184 : vector<8x256xf32>
    %186 = vector.extract_strided_slice %185 {offsets = [0, 0], sizes = [8, 128], strides = [1, 1]} : vector<8x256xf32> to vector<8x128xf32>
    %187 = arith.subf %140, %186 : vector<8x128xf32>
    %188 = vector.extract_strided_slice %185 {offsets = [0, 128], sizes = [8, 128], strides = [1, 1]} : vector<8x256xf32> to vector<8x128xf32>
    %189 = arith.addf %142, %188 : vector<8x128xf32>
    %c4 = arith.constant 4 : index
    %c0_154 = arith.constant 0 : index
    %c0_155 = arith.constant 0 : index
    %190 = vector.load %arg2[%c4, %c0_154, %c0_155] : memref<6x128x128xf32, #tpu.memory_space<vmem>>, vector<1x128x128xf32>
    %191 = vector.shape_cast %190 : vector<1x128x128xf32> to vector<128x128xf32>
    %cst_156 = arith.constant dense<0.000000e+00> : vector<8x128xf32>
    %192 = tpu.matmul %187, %191, %cst_156 {dimension_numbers = #tpu.dot_dimension_numbers<[1], [0], [0], [1], [0, 0, 1, 1], [], []>} : vector<8x128xf32>, vector<128x128xf32>, vector<8x128xf32> -> vector<8x128xf32>
    %c4_157 = arith.constant 4 : index
    %c0_158 = arith.constant 0 : index
    %c0_159 = arith.constant 0 : index
    %193 = vector.load %arg3[%c4_157, %c0_158, %c0_159] : memref<6x1x128xf32, #tpu.memory_space<vmem>>, vector<1x1x128xf32>
    %194 = vector.shape_cast %193 : vector<1x1x128xf32> to vector<1x128xf32>
    %195 = vector.broadcast %194 : vector<1x128xf32> to vector<8x128xf32>
    %196 = arith.addf %192, %195 : vector<8x128xf32>
    %cst_160 = arith.constant 0.000000e+00 : f32
    %197 = vector.broadcast %cst_160 : f32 to vector<8x128xf32>
    %198 = arith.maximumf %196, %197 : vector<8x128xf32>
    %c4_161 = arith.constant 4 : index
    %c0_162 = arith.constant 0 : index
    %c0_163 = arith.constant 0 : index
    %199 = vector.load %arg4[%c4_161, %c0_162, %c0_163] : memref<6x128x128xf32, #tpu.memory_space<vmem>>, vector<1x128x128xf32>
    %200 = vector.shape_cast %199 : vector<1x128x128xf32> to vector<128x128xf32>
    %cst_164 = arith.constant dense<0.000000e+00> : vector<8x128xf32>
    %201 = tpu.matmul %198, %200, %cst_164 {dimension_numbers = #tpu.dot_dimension_numbers<[1], [0], [0], [1], [0, 0, 1, 1], [], []>} : vector<8x128xf32>, vector<128x128xf32>, vector<8x128xf32> -> vector<8x128xf32>
    %c4_165 = arith.constant 4 : index
    %c0_166 = arith.constant 0 : index
    %c0_167 = arith.constant 0 : index
    %202 = vector.load %arg5[%c4_165, %c0_166, %c0_167] : memref<6x1x128xf32, #tpu.memory_space<vmem>>, vector<1x1x128xf32>
    %203 = vector.shape_cast %202 : vector<1x1x128xf32> to vector<1x128xf32>
    %204 = vector.broadcast %203 : vector<1x128xf32> to vector<8x128xf32>
    %205 = arith.addf %201, %204 : vector<8x128xf32>
    %cst_168 = arith.constant 0.000000e+00 : f32
    %206 = vector.broadcast %cst_168 : f32 to vector<8x128xf32>
    %207 = arith.maximumf %205, %206 : vector<8x128xf32>
    %c4_169 = arith.constant 4 : index
    %c0_170 = arith.constant 0 : index
    %c0_171 = arith.constant 0 : index
    %208 = vector.load %arg6[%c4_169, %c0_170, %c0_171] : memref<6x128x128xf32, #tpu.memory_space<vmem>>, vector<1x128x128xf32>
    %209 = vector.shape_cast %208 : vector<1x128x128xf32> to vector<128x128xf32>
    %cst_172 = arith.constant dense<0.000000e+00> : vector<8x128xf32>
    %210 = tpu.matmul %207, %209, %cst_172 {dimension_numbers = #tpu.dot_dimension_numbers<[1], [0], [0], [1], [0, 0, 1, 1], [], []>} : vector<8x128xf32>, vector<128x128xf32>, vector<8x128xf32> -> vector<8x128xf32>
    %c4_173 = arith.constant 4 : index
    %c0_174 = arith.constant 0 : index
    %c0_175 = arith.constant 0 : index
    %211 = vector.load %arg7[%c4_173, %c0_174, %c0_175] : memref<6x1x128xf32, #tpu.memory_space<vmem>>, vector<1x1x128xf32>
    %212 = vector.shape_cast %211 : vector<1x1x128xf32> to vector<1x128xf32>
    %213 = vector.broadcast %212 : vector<1x128xf32> to vector<8x128xf32>
    %214 = arith.addf %210, %213 : vector<8x128xf32>
    %cst_176 = arith.constant 0.000000e+00 : f32
    %215 = vector.broadcast %cst_176 : f32 to vector<8x128xf32>
    %216 = arith.maximumf %214, %215 : vector<8x128xf32>
    %c4_177 = arith.constant 4 : index
    %c0_178 = arith.constant 0 : index
    %c0_179 = arith.constant 0 : index
    %217 = vector.load %arg8[%c4_177, %c0_178, %c0_179] : memref<6x128x128xf32, #tpu.memory_space<vmem>>, vector<1x128x128xf32>
    %218 = vector.shape_cast %217 : vector<1x128x128xf32> to vector<128x128xf32>
    %cst_180 = arith.constant dense<0.000000e+00> : vector<8x128xf32>
    %219 = tpu.matmul %216, %218, %cst_180 {dimension_numbers = #tpu.dot_dimension_numbers<[1], [0], [0], [1], [0, 0, 1, 1], [], []>} : vector<8x128xf32>, vector<128x128xf32>, vector<8x128xf32> -> vector<8x128xf32>
    %c4_181 = arith.constant 4 : index
    %c0_182 = arith.constant 0 : index
    %c0_183 = arith.constant 0 : index
    %220 = vector.load %arg9[%c4_181, %c0_182, %c0_183] : memref<6x1x128xf32, #tpu.memory_space<vmem>>, vector<1x1x128xf32>
    %221 = vector.shape_cast %220 : vector<1x1x128xf32> to vector<1x128xf32>
    %222 = vector.broadcast %221 : vector<1x128xf32> to vector<8x128xf32>
    %223 = arith.addf %219, %222 : vector<8x128xf32>
    %cst_184 = arith.constant 0.000000e+00 : f32
    %224 = vector.broadcast %cst_184 : f32 to vector<8x128xf32>
    %225 = arith.maximumf %223, %224 : vector<8x128xf32>
    %c4_185 = arith.constant 4 : index
    %c0_186 = arith.constant 0 : index
    %c0_187 = arith.constant 0 : index
    %226 = vector.load %arg10[%c4_185, %c0_186, %c0_187] : memref<6x128x256xf32, #tpu.memory_space<vmem>>, vector<1x128x256xf32>
    %227 = vector.shape_cast %226 : vector<1x128x256xf32> to vector<128x256xf32>
    %cst_188 = arith.constant dense<0.000000e+00> : vector<8x256xf32>
    %228 = tpu.matmul %225, %227, %cst_188 {dimension_numbers = #tpu.dot_dimension_numbers<[1], [0], [0], [1], [0, 0, 1, 1], [], []>} : vector<8x128xf32>, vector<128x256xf32>, vector<8x256xf32> -> vector<8x256xf32>
    %c4_189 = arith.constant 4 : index
    %c0_190 = arith.constant 0 : index
    %c0_191 = arith.constant 0 : index
    %229 = vector.load %arg11[%c4_189, %c0_190, %c0_191] : memref<6x1x256xf32, #tpu.memory_space<vmem>>, vector<1x1x256xf32>
    %230 = vector.shape_cast %229 : vector<1x1x256xf32> to vector<1x256xf32>
    %231 = vector.broadcast %230 : vector<1x256xf32> to vector<8x256xf32>
    %232 = arith.addf %228, %231 : vector<8x256xf32>
    %233 = vector.extract_strided_slice %232 {offsets = [0, 0], sizes = [8, 128], strides = [1, 1]} : vector<8x256xf32> to vector<8x128xf32>
    %234 = arith.subf %187, %233 : vector<8x128xf32>
    %235 = vector.extract_strided_slice %232 {offsets = [0, 128], sizes = [8, 128], strides = [1, 1]} : vector<8x256xf32> to vector<8x128xf32>
    %236 = arith.addf %189, %235 : vector<8x128xf32>
    %c5 = arith.constant 5 : index
    %c0_192 = arith.constant 0 : index
    %c0_193 = arith.constant 0 : index
    %237 = vector.load %arg2[%c5, %c0_192, %c0_193] : memref<6x128x128xf32, #tpu.memory_space<vmem>>, vector<1x128x128xf32>
    %238 = vector.shape_cast %237 : vector<1x128x128xf32> to vector<128x128xf32>
    %cst_194 = arith.constant dense<0.000000e+00> : vector<8x128xf32>
    %239 = tpu.matmul %234, %238, %cst_194 {dimension_numbers = #tpu.dot_dimension_numbers<[1], [0], [0], [1], [0, 0, 1, 1], [], []>} : vector<8x128xf32>, vector<128x128xf32>, vector<8x128xf32> -> vector<8x128xf32>
    %c5_195 = arith.constant 5 : index
    %c0_196 = arith.constant 0 : index
    %c0_197 = arith.constant 0 : index
    %240 = vector.load %arg3[%c5_195, %c0_196, %c0_197] : memref<6x1x128xf32, #tpu.memory_space<vmem>>, vector<1x1x128xf32>
    %241 = vector.shape_cast %240 : vector<1x1x128xf32> to vector<1x128xf32>
    %242 = vector.broadcast %241 : vector<1x128xf32> to vector<8x128xf32>
    %243 = arith.addf %239, %242 : vector<8x128xf32>
    %cst_198 = arith.constant 0.000000e+00 : f32
    %244 = vector.broadcast %cst_198 : f32 to vector<8x128xf32>
    %245 = arith.maximumf %243, %244 : vector<8x128xf32>
    %c5_199 = arith.constant 5 : index
    %c0_200 = arith.constant 0 : index
    %c0_201 = arith.constant 0 : index
    %246 = vector.load %arg4[%c5_199, %c0_200, %c0_201] : memref<6x128x128xf32, #tpu.memory_space<vmem>>, vector<1x128x128xf32>
    %247 = vector.shape_cast %246 : vector<1x128x128xf32> to vector<128x128xf32>
    %cst_202 = arith.constant dense<0.000000e+00> : vector<8x128xf32>
    %248 = tpu.matmul %245, %247, %cst_202 {dimension_numbers = #tpu.dot_dimension_numbers<[1], [0], [0], [1], [0, 0, 1, 1], [], []>} : vector<8x128xf32>, vector<128x128xf32>, vector<8x128xf32> -> vector<8x128xf32>
    %c5_203 = arith.constant 5 : index
    %c0_204 = arith.constant 0 : index
    %c0_205 = arith.constant 0 : index
    %249 = vector.load %arg5[%c5_203, %c0_204, %c0_205] : memref<6x1x128xf32, #tpu.memory_space<vmem>>, vector<1x1x128xf32>
    %250 = vector.shape_cast %249 : vector<1x1x128xf32> to vector<1x128xf32>
    %251 = vector.broadcast %250 : vector<1x128xf32> to vector<8x128xf32>
    %252 = arith.addf %248, %251 : vector<8x128xf32>
    %cst_206 = arith.constant 0.000000e+00 : f32
    %253 = vector.broadcast %cst_206 : f32 to vector<8x128xf32>
    %254 = arith.maximumf %252, %253 : vector<8x128xf32>
    %c5_207 = arith.constant 5 : index
    %c0_208 = arith.constant 0 : index
    %c0_209 = arith.constant 0 : index
    %255 = vector.load %arg6[%c5_207, %c0_208, %c0_209] : memref<6x128x128xf32, #tpu.memory_space<vmem>>, vector<1x128x128xf32>
    %256 = vector.shape_cast %255 : vector<1x128x128xf32> to vector<128x128xf32>
    %cst_210 = arith.constant dense<0.000000e+00> : vector<8x128xf32>
    %257 = tpu.matmul %254, %256, %cst_210 {dimension_numbers = #tpu.dot_dimension_numbers<[1], [0], [0], [1], [0, 0, 1, 1], [], []>} : vector<8x128xf32>, vector<128x128xf32>, vector<8x128xf32> -> vector<8x128xf32>
    %c5_211 = arith.constant 5 : index
    %c0_212 = arith.constant 0 : index
    %c0_213 = arith.constant 0 : index
    %258 = vector.load %arg7[%c5_211, %c0_212, %c0_213] : memref<6x1x128xf32, #tpu.memory_space<vmem>>, vector<1x1x128xf32>
    %259 = vector.shape_cast %258 : vector<1x1x128xf32> to vector<1x128xf32>
    %260 = vector.broadcast %259 : vector<1x128xf32> to vector<8x128xf32>
    %261 = arith.addf %257, %260 : vector<8x128xf32>
    %cst_214 = arith.constant 0.000000e+00 : f32
    %262 = vector.broadcast %cst_214 : f32 to vector<8x128xf32>
    %263 = arith.maximumf %261, %262 : vector<8x128xf32>
    %c5_215 = arith.constant 5 : index
    %c0_216 = arith.constant 0 : index
    %c0_217 = arith.constant 0 : index
    %264 = vector.load %arg8[%c5_215, %c0_216, %c0_217] : memref<6x128x128xf32, #tpu.memory_space<vmem>>, vector<1x128x128xf32>
    %265 = vector.shape_cast %264 : vector<1x128x128xf32> to vector<128x128xf32>
    %cst_218 = arith.constant dense<0.000000e+00> : vector<8x128xf32>
    %266 = tpu.matmul %263, %265, %cst_218 {dimension_numbers = #tpu.dot_dimension_numbers<[1], [0], [0], [1], [0, 0, 1, 1], [], []>} : vector<8x128xf32>, vector<128x128xf32>, vector<8x128xf32> -> vector<8x128xf32>
    %c5_219 = arith.constant 5 : index
    %c0_220 = arith.constant 0 : index
    %c0_221 = arith.constant 0 : index
    %267 = vector.load %arg9[%c5_219, %c0_220, %c0_221] : memref<6x1x128xf32, #tpu.memory_space<vmem>>, vector<1x1x128xf32>
    %268 = vector.shape_cast %267 : vector<1x1x128xf32> to vector<1x128xf32>
    %269 = vector.broadcast %268 : vector<1x128xf32> to vector<8x128xf32>
    %270 = arith.addf %266, %269 : vector<8x128xf32>
    %cst_222 = arith.constant 0.000000e+00 : f32
    %271 = vector.broadcast %cst_222 : f32 to vector<8x128xf32>
    %272 = arith.maximumf %270, %271 : vector<8x128xf32>
    %c5_223 = arith.constant 5 : index
    %c0_224 = arith.constant 0 : index
    %c0_225 = arith.constant 0 : index
    %273 = vector.load %arg10[%c5_223, %c0_224, %c0_225] : memref<6x128x256xf32, #tpu.memory_space<vmem>>, vector<1x128x256xf32>
    %274 = vector.shape_cast %273 : vector<1x128x256xf32> to vector<128x256xf32>
    %cst_226 = arith.constant dense<0.000000e+00> : vector<8x256xf32>
    %275 = tpu.matmul %272, %274, %cst_226 {dimension_numbers = #tpu.dot_dimension_numbers<[1], [0], [0], [1], [0, 0, 1, 1], [], []>} : vector<8x128xf32>, vector<128x256xf32>, vector<8x256xf32> -> vector<8x256xf32>
    %c5_227 = arith.constant 5 : index
    %c0_228 = arith.constant 0 : index
    %c0_229 = arith.constant 0 : index
    %276 = vector.load %arg11[%c5_227, %c0_228, %c0_229] : memref<6x1x256xf32, #tpu.memory_space<vmem>>, vector<1x1x256xf32>
    %277 = vector.shape_cast %276 : vector<1x1x256xf32> to vector<1x256xf32>
    %278 = vector.broadcast %277 : vector<1x256xf32> to vector<8x256xf32>
    %279 = arith.addf %275, %278 : vector<8x256xf32>
    %280 = vector.extract_strided_slice %279 {offsets = [0, 128], sizes = [8, 128], strides = [1, 1]} : vector<8x256xf32> to vector<8x128xf32>
    %281 = arith.addf %236, %280 : vector<8x128xf32>
    %c0_230 = arith.constant 0 : index
    %c0_231 = arith.constant 0 : index
    %282 = vector.load %arg12[%c0_230, %c0_231] : memref<8x128xf32, #tpu.memory_space<vmem>>, vector<8x128xf32>
    tpu.vector_store %arg12[%c0_230, %c0_231], %281 {strides = array<i32>} : memref<8x128xf32, #tpu.memory_space<vmem>>, vector<8x128xf32>,
    return
  }
  func.func @transform_0(%arg0: i32) -> (i32, i32) {
    %c0_i32 = arith.constant 0 : i32
    %c0_i32_0 = arith.constant 0 : i32
    return %arg0, %c0_i32 : i32, i32
  }
  func.func @transform_1(%arg0: i32) -> (i32, i32, i32) {
    %c0_i32 = arith.constant 0 : i32
    %c0_i32_0 = arith.constant 0 : i32
    %c0_i32_1 = arith.constant 0 : i32
    %c0_i32_2 = arith.constant 0 : i32
    return %c0_i32, %c0_i32_0, %c0_i32_1 : i32, i32, i32
  }
  func.func @transform_2(%arg0: i32) -> (i32, i32, i32) {
    %c0_i32 = arith.constant 0 : i32
    %c0_i32_0 = arith.constant 0 : i32
    %c0_i32_1 = arith.constant 0 : i32
    %c0_i32_2 = arith.constant 0 : i32
    return %c0_i32, %c0_i32_0, %c0_i32_1 : i32, i32, i32
  }
  func.func @transform_3(%arg0: i32) -> (i32, i32, i32) {
    %c0_i32 = arith.constant 0 : i32
    %c0_i32_0 = arith.constant 0 : i32
    %c0_i32_1 = arith.constant 0 : i32
    %c0_i32_2 = arith.constant 0 : i32
    return %c0_i32, %c0_i32_0, %c0_i32_1 : i32, i32, i32
  }
  func.func @transform_4(%arg0: i32) -> (i32, i32, i32) {
    %c0_i32 = arith.constant 0 : i32
    %c0_i32_0 = arith.constant 0 : i32
    %c0_i32_1 = arith.constant 0 : i32
    %c0_i32_2 = arith.constant 0 : i32
    return %c0_i32, %c0_i32_0, %c0_i32_1 : i32, i32, i32
  }
  func.func @transform_5(%arg0: i32) -> (i32, i32, i32) {
    %c0_i32 = arith.constant 0 : i32
    %c0_i32_0 = arith.constant 0 : i32
    %c0_i32_1 = arith.constant 0 : i32
    %c0_i32_2 = arith.constant 0 : i32
    return %c0_i32, %c0_i32_0, %c0_i32_1 : i32, i32, i32
  }
  func.func @transform_6(%arg0: i32) -> (i32, i32, i32) {
    %c0_i32 = arith.constant 0 : i32
    %c0_i32_0 = arith.constant 0 : i32
    %c0_i32_1 = arith.constant 0 : i32
    %c0_i32_2 = arith.constant 0 : i32
    return %c0_i32, %c0_i32_0, %c0_i32_1 : i32, i32, i32
  }
  func.func @transform_7(%arg0: i32) -> (i32, i32, i32) {
    %c0_i32 = arith.constant 0 : i32
    %c0_i32_0 = arith.constant 0 : i32
    %c0_i32_1 = arith.constant 0 : i32
    %c0_i32_2 = arith.constant 0 : i32
    return %c0_i32, %c0_i32_0, %c0_i32_1 : i32, i32, i32
  }
  func.func @transform_8(%arg0: i32) -> (i32, i32, i32) {
    %c0_i32 = arith.constant 0 : i32
    %c0_i32_0 = arith.constant 0 : i32
    %c0_i32_1 = arith.constant 0 : i32
    %c0_i32_2 = arith.constant 0 : i32
    return %c0_i32, %c0_i32_0, %c0_i32_1 : i32, i32, i32
  }
  func.func @transform_9(%arg0: i32) -> (i32, i32, i32) {
    %c0_i32 = arith.constant 0 : i32
    %c0_i32_0 = arith.constant 0 : i32
    %c0_i32_1 = arith.constant 0 : i32
    %c0_i32_2 = arith.constant 0 : i32
    return %c0_i32, %c0_i32_0, %c0_i32_1 : i32, i32, i32
  }
  func.func @transform_10(%arg0: i32) -> (i32, i32, i32) {
    %c0_i32 = arith.constant 0 : i32
    %c0_i32_0 = arith.constant 0 : i32
    %c0_i32_1 = arith.constant 0 : i32
    %c0_i32_2 = arith.constant 0 : i32
    return %c0_i32, %c0_i32_0, %c0_i32_1 : i32, i32, i32
  }
  func.func @transform_11(%arg0: i32) -> (i32, i32) {
    %c0_i32 = arith.constant 0 : i32
    %c0_i32_0 = arith.constant 0 : i32
    return %arg0, %c0_i32 : i32, i32
  }
}

</mosaic_0001>

<llo_original>
// kernel: tpu_custom_call.1
$region0: #{tpu_custom_call.1}
  #allocation0 [shape = 'u32[]', space=smem, size = 0x4, offset = 0x4, fixed_abs, tag = 'smem constant byte address 0x4 - core index']
  #allocation1 [shape = 'u32[72,128]{1,0:T(1,128)}', space=vmem, size = 0x9000, scoped, tag = 'internal scratch']
  %s0 = inlined_call_operand.hbm [shape: f32[8,128], index: 0, kind: input, shape index: {}]
  %s1 = inlined_call_operand.hbm [shape: f32[6,128,128], index: 1, kind: input, shape index: {}]
  %s2 = inlined_call_operand.hbm [shape: f32[6,1,128], index: 2, kind: input, shape index: {}]
  %s3 = inlined_call_operand.hbm [shape: f32[6,128,128], index: 3, kind: input, shape index: {}]
  %s4 = inlined_call_operand.hbm [shape: f32[6,1,128], index: 4, kind: input, shape index: {}]
  %s5 = inlined_call_operand.hbm [shape: f32[6,128,128], index: 5, kind: input, shape index: {}]
  %s6 = inlined_call_operand.hbm [shape: f32[6,1,128], index: 6, kind: input, shape index: {}]
  %s7 = inlined_call_operand.hbm [shape: f32[6,128,128], index: 7, kind: input, shape index: {}]
  %s8 = inlined_call_operand.vmem [shape: f32[6,1,128], index: 8, kind: input, shape index: {}]
  %s9 = inlined_call_operand.hbm [shape: f32[6,128,256], index: 9, kind: input, shape index: {}]
  %s10 = inlined_call_operand.hbm [shape: f32[6,1,256], index: 10, kind: input, shape index: {}]
  %s11 = inlined_call_operand.hbm [shape: f32[8,128], index: 11, kind: output, shape index: {}]
  %s12 = sld [smem:[#allocation0]]
  $region94: #{tpu_custom_call.1} parent=0
    _
  %s14 = ssub.s32 1, %s12
  %s15 = scalar_select 0, %s14, %s12
  $region1: #{tpu_custom_call.1} parent=0
    #allocation2 [shape = 'u8[4096]{0}', space=vmem, size = 0x1000, scoped, tag = 'input window, operand 0, single buffered']
    #allocation3 [shape = 's32[1]{0}', space=sflag, size = 0x4, scoped, tag = 'scoped memory for tpu_custom_call.1']
    #allocation4 [shape = 's32[1]{0}', space=sflag, size = 0x4, scoped, tag = 'scoped memory for tpu_custom_call.1']
    #allocation5 [shape = 'u8[393216]{0}', space=vmem, size = 0x60000, scoped, tag = 'input window, operand 1, single buffered']
    #allocation6 [shape = 's32[1]{0}', space=sflag, size = 0x4, scoped, tag = 'scoped memory for tpu_custom_call.1']
    #allocation7 [shape = 'u8[3072]{0}', space=vmem, size = 0xc00, scoped, tag = 'input window, operand 2, single buffered']
    #allocation8 [shape = 'u8[393216]{0}', space=vmem, size = 0x60000, scoped, tag = 'input window, operand 3, single buffered']
    #allocation9 [shape = 's32[1]{0}', space=sflag, size = 0x4, scoped, tag = 'scoped memory for tpu_custom_call.1']
    #allocation10 [shape = 'u8[3072]{0}', space=vmem, size = 0xc00, scoped, tag = 'input window, operand 4, single buffered']
    #allocation11 [shape = 'u8[393216]{0}', space=vmem, size = 0x60000, scoped, tag = 'input window, operand 5, single buffered']
    #allocation12 [shape = 's32[1]{0}', space=sflag, size = 0x4, scoped, tag = 'scoped memory for tpu_custom_call.1']
    #allocation13 [shape = 'u8[3072]{0}', space=vmem, size = 0xc00, scoped, tag = 'input window, operand 6, single buffered']
    #allocation14 [shape = 'u8[393216]{0}', space=vmem, size = 0x60000, scoped, tag = 'input window, operand 7, single buffered']
    #allocation15 [shape = 's32[1]{0}', space=sflag, size = 0x4, scoped, tag = 'scoped memory for tpu_custom_call.1']
    #allocation16 [shape = 'u8[786432]{0}', space=vmem, size = 0xc0000, scoped, tag = 'input window, operand 9, single buffered']
    #allocation17 [shape = 'u8[6144]{0}', space=vmem, size = 0x1800, scoped, tag = 'input window, operand 10, single buffered']
    #allocation18 [shape = 's32[1]{0}', space=sflag, size = 0x4, scoped, tag = 'scoped memory for tpu_custom_call.1']
    #allocation19 [shape = 'u8[4096]{0}', space=vmem, size = 0x1000, scoped, tag = 'output window, operand 0, single buffered']
    %16 = vsyncpa [#allocation3], 0
    %17 = vsyncpa [#allocation6], 0
    %18 = vsyncpa [#allocation9], 0
    %19 = vsyncpa [#allocation12], 0
    %20 = vsyncpa [#allocation15], 0
    %21 = vsyncpa [#allocation18], 0
    %22 = vsyncpa [#allocation4], 0
    // Predicated region
    $region2: #{tpu_custom_call.1} parent=1 // pred_check
      _
    $region3: #{tpu_custom_call.1} parent=1 // pred_check_branch
      %24 = sbr.rel (0) target = $region5
    $region4: #{tpu_custom_call.1} parent=1 // pred_region
      %26 = vsyncadd [#allocation3], 0
      %s28 = sshll.u32 %s0, 4
      %s29 = int_to_ptr.hbm [resolvable:$true] %s28
      %s30 = sshll.u32 [#allocation2], 4
      %s31 = int_to_ptr.vmem [resolvable:$true] %s30
      %33 = dma.hbm_to_vmem [thread:$0]  %s29, 128, %s31, [#allocation3]
    $region5: #{tpu_custom_call.1} parent=1 // pred_fallthru
      _
    // Predicated region
    $region6: #{tpu_custom_call.1} parent=1 // pred_check
      _
    $region7: #{tpu_custom_call.1} parent=1 // pred_check_branch
      %35 = sbr.rel (0) target = $region9
    $region8: #{tpu_custom_call.1} parent=1 // pred_region
      %37 = vsyncadd [#allocation6], 0
      %s38 = sshll.u32 %s1, 4
      %s39 = int_to_ptr.hbm [resolvable:$true] %s38
      %s40 = sshll.u32 [#allocation5], 4
      %s41 = int_to_ptr.vmem [resolvable:$true] %s40
      %46 = dma.hbm_to_vmem [thread:$0]  %s39, 12288, %s41, [#allocation6], 128, 128, 8
    $region9: #{tpu_custom_call.1} parent=1 // pred_fallthru
      _
    // Predicated region
    $region10: #{tpu_custom_call.1} parent=1 // pred_check
      _
    $region11: #{tpu_custom_call.1} parent=1 // pred_check_branch
      %48 = sbr.rel (0) target = $region13
    $region12: #{tpu_custom_call.1} parent=1 // pred_region
      %50 = vsyncadd [#allocation6], 0
      %s51 = sshll.u32 %s2, 4
      %s52 = int_to_ptr.hbm [resolvable:$true] %s51
      %s53 = sshll.u32 [#allocation7], 4
      %s54 = int_to_ptr.vmem [resolvable:$true] %s53
      %59 = dma.hbm_to_vmem [thread:$0]  %s52, 96, %s54, [#allocation6], 16, 16, 1
    $region13: #{tpu_custom_call.1} parent=1 // pred_fallthru
      _
    // Predicated region
    $region14: #{tpu_custom_call.1} parent=1 // pred_check
      _
    $region15: #{tpu_custom_call.1} parent=1 // pred_check_branch
      %61 = sbr.rel (0) target = $region17
    $region16: #{tpu_custom_call.1} parent=1 // pred_region
      %63 = vsyncadd [#allocation9], 0
      %s64 = sshll.u32 %s3, 4
      %s65 = int_to_ptr.hbm [resolvable:$true] %s64
      %s66 = sshll.u32 [#allocation8], 4
      %s67 = int_to_ptr.vmem [resolvable:$true] %s66
      %72 = dma.hbm_to_vmem [thread:$0]  %s65, 12288, %s67, [#allocation9], 128, 128, 8
    $region17: #{tpu_custom_call.1} parent=1 // pred_fallthru
      _
    // Predicated region
    $region18: #{tpu_custom_call.1} parent=1 // pred_check
      _
    $region19: #{tpu_custom_call.1} parent=1 // pred_check_branch
      %74 = sbr.rel (0) target = $region21
    $region20: #{tpu_custom_call.1} parent=1 // pred_region
      %76 = vsyncadd [#allocation9], 0
      %s77 = sshll.u32 %s4, 4
      %s78 = int_to_ptr.hbm [resolvable:$true] %s77
      %s79 = sshll.u32 [#allocation10], 4
      %s80 = int_to_ptr.vmem [resolvable:$true] %s79
      %85 = dma.hbm_to_vmem [thread:$0]  %s78, 96, %s80, [#allocation9], 16, 16, 1
    $region21: #{tpu_custom_call.1} parent=1 // pred_fallthru
      _
    // Predicated region
    $region22: #{tpu_custom_call.1} parent=1 // pred_check
      _
    $region23: #{tpu_custom_call.1} parent=1 // pred_check_branch
      %87 = sbr.rel (0) target = $region25
    $region24: #{tpu_custom_call.1} parent=1 // pred_region
      %89 = vsyncadd [#allocation12], 0
      %s90 = sshll.u32 %s5, 4
      %s91 = int_to_ptr.hbm [resolvable:$true] %s90
      %s92 = sshll.u32 [#allocation11], 4
      %s93 = int_to_ptr.vmem [resolvable:$true] %s92
      %98 = dma.hbm_to_vmem [thread:$0]  %s91, 12288, %s93, [#allocation12], 128, 128, 8
    $region25: #{tpu_custom_call.1} parent=1 // pred_fallthru
      _
    // Predicated region
    $region26: #{tpu_custom_call.1} parent=1 // pred_check
      _
    $region27: #{tpu_custom_call.1} parent=1 // pred_check_branch
      %100 = sbr.rel (0) target = $region29
    $region28: #{tpu_custom_call.1} parent=1 // pred_region
      %102 = vsyncadd [#allocation12], 0
      %s103 = sshll.u32 %s6, 4
      %s104 = int_to_ptr.hbm [resolvable:$true] %s103
      %s105 = sshll.u32 [#allocation13], 4
      %s106 = int_to_ptr.vmem [resolvable:$true] %s105
      %111 = dma.hbm_to_vmem [thread:$0]  %s104, 96, %s106, [#allocation12], 16, 16, 1
    $region29: #{tpu_custom_call.1} parent=1 // pred_fallthru
      _
    // Predicated region
    $region30: #{tpu_custom_call.1} parent=1 // pred_check
      _
    $region31: #{tpu_custom_call.1} parent=1 // pred_check_branch
      %113 = sbr.rel (0) target = $region33
    $region32: #{tpu_custom_call.1} parent=1 // pred_region
      %115 = vsyncadd [#allocation15], 0
      %s116 = sshll.u32 %s7, 4
      %s117 = int_to_ptr.hbm [resolvable:$true] %s116
      %s118 = sshll.u32 [#allocation14], 4
      %s119 = int_to_ptr.vmem [resolvable:$true] %s118
      %124 = dma.hbm_to_vmem [thread:$0]  %s117, 12288, %s119, [#allocation15], 128, 128, 8
    $region33: #{tpu_custom_call.1} parent=1 // pred_fallthru
      _
    // Predicated region
    $region34: #{tpu_custom_call.1} parent=1 // pred_check
      _
    $region35: #{tpu_custom_call.1} parent=1 // pred_check_branch
      %126 = sbr.rel (0) target = $region37
    $region36: #{tpu_custom_call.1} parent=1 // pred_region
      _
    $region37: #{tpu_custom_call.1} parent=1 // pred_fallthru
      _
    // Predicated region
    $region38: #{tpu_custom_call.1} parent=1 // pred_check
      _
    $region39: #{tpu_custom_call.1} parent=1 // pred_check_branch
      %128 = sbr.rel (0) target = $region41
    $region40: #{tpu_custom_call.1} parent=1 // pred_region
      %130 = vsyncadd [#allocation15], 0
      %s131 = sshll.u32 %s9, 4
      %s132 = int_to_ptr.hbm [resolvable:$true] %s131
      %s133 = sshll.u32 [#allocation16], 4
      %s134 = int_to_ptr.vmem [resolvable:$true] %s133
      %139 = dma.hbm_to_vmem [thread:$0]  %s132, 24576, %s134, [#allocation15], 256, 256, 16
    $region41: #{tpu_custom_call.1} parent=1 // pred_fallthru
      _
    // Predicated region
    $region42: #{tpu_custom_call.1} parent=1 // pred_check
      _
    $region43: #{tpu_custom_call.1} parent=1 // pred_check_branch
      %141 = sbr.rel (0) target = $region45
    $region44: #{tpu_custom_call.1} parent=1 // pred_region
      %143 = vsyncadd [#allocation18], 0
      %s144 = sshll.u32 %s10, 4
      %s145 = int_to_ptr.hbm [resolvable:$true] %s144
      %s146 = sshll.u32 [#allocation17], 4
      %s147 = int_to_ptr.vmem [resolvable:$true] %s146
      %152 = dma.hbm_to_vmem [thread:$0]  %s145, 192, %s147, [#allocation18], 32, 32, 2
    $region45: #{tpu_custom_call.1} parent=1 // pred_fallthru
      _
    // Predicated region
    $region46: #{tpu_custom_call.1} parent=1 // pred_check
      _
    $region47: #{tpu_custom_call.1} parent=1 // pred_check_branch
      %154 = sbr.rel (0) target = $region49
    $region48: #{tpu_custom_call.1} parent=1 // pred_region
      %156 = dma.done [#allocation3], 128
    $region49: #{tpu_custom_call.1} parent=1 // pred_fallthru
      _
    // Predicated region
    $region50: #{tpu_custom_call.1} parent=1 // pred_check
      _
    $region51: #{tpu_custom_call.1} parent=1 // pred_check_branch
      %158 = sbr.rel (0) target = $region53
    $region52: #{tpu_custom_call.1} parent=1 // pred_region
      %160 = dma.done [#allocation6], 12288
    $region53: #{tpu_custom_call.1} parent=1 // pred_fallthru
      _
    // Predicated region
    $region54: #{tpu_custom_call.1} parent=1 // pred_check
      _
    $region55: #{tpu_custom_call.1} parent=1 // pred_check_branch
      %162 = sbr.rel (0) target = $region57
    $region56: #{tpu_custom_call.1} parent=1 // pred_region
      %164 = dma.done [#allocation6], 96
    $region57: #{tpu_custom_call.1} parent=1 // pred_fallthru
      _
    // Predicated region
    $region58: #{tpu_custom_call.1} parent=1 // pred_check
      _
    $region59: #{tpu_custom_call.1} parent=1 // pred_check_branch
      %166 = sbr.rel (0) target = $region61
    $region60: #{tpu_custom_call.1} parent=1 // pred_region
      %168 = dma.done [#allocation9], 12288
    $region61: #{tpu_custom_call.1} parent=1 // pred_fallthru
      _
    // Predicated region
    $region62: #{tpu_custom_call.1} parent=1 // pred_check
      _
    $region63: #{tpu_custom_call.1} parent=1 // pred_check_branch
      %170 = sbr.rel (0) target = $region65
    $region64: #{tpu_custom_call.1} parent=1 // pred_region
      %172 = dma.done [#allocation9], 96
    $region65: #{tpu_custom_call.1} parent=1 // pred_fallthru
      _
    // Predicated region
    $region66: #{tpu_custom_call.1} parent=1 // pred_check
      _
    $region67: #{tpu_custom_call.1} parent=1 // pred_check_branch
      %174 = sbr.rel (0) target = $region69
    $region68: #{tpu_custom_call.1} parent=1 // pred_region
      %176 = dma.done [#allocation12], 12288
    $region69: #{tpu_custom_call.1} parent=1 // pred_fallthru
      _
    // Predicated region
    $region70: #{tpu_custom_call.1} parent=1 // pred_check
      _
    $region71: #{tpu_custom_call.1} parent=1 // pred_check_branch
      %178 = sbr.rel (0) target = $region73
    $region72: #{tpu_custom_call.1} parent=1 // pred_region
      %180 = dma.done [#allocation12], 96
    $region73: #{tpu_custom_call.1} parent=1 // pred_fallthru
      _
    // Predicated region
    $region74: #{tpu_custom_call.1} parent=1 // pred_check
      _
    $region75: #{tpu_custom_call.1} parent=1 // pred_check_branch
      %182 = sbr.rel (0) target = $region77
    $region76: #{tpu_custom_call.1} parent=1 // pred_region
      %184 = dma.done [#allocation15], 12288
    $region77: #{tpu_custom_call.1} parent=1 // pred_fallthru
      _
    // Predicated region
    $region78: #{tpu_custom_call.1} parent=1 // pred_check
      _
    $region79: #{tpu_custom_call.1} parent=1 // pred_check_branch
      %186 = sbr.rel (0) target = $region81
    $region80: #{tpu_custom_call.1} parent=1 // pred_region
      %188 = dma.done [#allocation15], 24576
    $region81: #{tpu_custom_call.1} parent=1 // pred_fallthru
      _
    // Predicated region
    $region82: #{tpu_custom_call.1} parent=1 // pred_check
      _
    $region83: #{tpu_custom_call.1} parent=1 // pred_check_branch
      %190 = sbr.rel (0) target = $region85
    $region84: #{tpu_custom_call.1} parent=1 // pred_region
      %192 = dma.done [#allocation18], 192
    $region85: #{tpu_custom_call.1} parent=1 // pred_fallthru
      _
    %v193 = vld [vmem:[#allocation2] sm:$0xff]
    %v194 = vld [vmem:[#allocation5] sm:$0xff]
    %v195 = vld [vmem:[#allocation5 + $0x8] sm:$0xff]
    %v196 = vld [vmem:[#allocation5 + $0x10] sm:$0xff]
    %v197 = vld [vmem:[#allocation5 + $0x18] sm:$0xff]
    %v198 = vld [vmem:[#allocation5 + $0x20] sm:$0xff]
    %v199 = vld [vmem:[#allocation5 + $0x28] sm:$0xff]
    %v200 = vld [vmem:[#allocation5 + $0x30] sm:$0xff]
    %v201 = vld [vmem:[#allocation5 + $0x38] sm:$0xff]
    %v202 = vld [vmem:[#allocation5 + $0x40] sm:$0xff]
    %v203 = vld [vmem:[#allocation5 + $0x48] sm:$0xff]
    %v204 = vld [vmem:[#allocation5 + $0x50] sm:$0xff]
    %v205 = vld [vmem:[#allocation5 + $0x58] sm:$0xff]
    %v206 = vld [vmem:[#allocation5 + $0x60] sm:$0xff]
    %v207 = vld [vmem:[#allocation5 + $0x68] sm:$0xff]
    %v208 = vld [vmem:[#allocation5 + $0x70] sm:$0xff]
    %v209 = vld [vmem:[#allocation5 + $0x78] sm:$0xff]
    %v210 = vld [vmem:[#allocation7] sm:$0x1]
    %v212 = vperm.slane %v210, 0
    %214 = vmatpush.msra.mxu0 %v209
    %215 = vmatpush.msra.mxu0 %v208
    %216 = vmatpush.msra.mxu0 %v207
    %217 = vmatpush.msra.mxu0 %v206
    %218 = vmatpush.msra.mxu0 %v205
    %219 = vmatpush.msra.mxu0 %v204
    %220 = vmatpush.msra.mxu0 %v203
    %221 = vmatpush.msra.mxu0 %v202
    %222 = vmatpush.msra.mxu0 %v201
    %223 = vmatpush.msra.mxu0 %v200
    %224 = vmatpush.msra.mxu0 %v199
    %225 = vmatpush.msra.mxu0 %v198
    %226 = vmatpush.msra.mxu0 %v197
    %227 = vmatpush.msra.mxu0 %v196
    %228 = vmatpush.msra.mxu0 %v195
    %229 = vmatpush.msra.mxu0 %v194
    %230 = vmatmul.f32.gmra.mxu0 %v193
    %v231 = vpop.f32.mrf.mxu0
    %v232 = vadd.f32 %v212, %v231
    %233 = vdwg.mxu0
    %v234 = vmax.f32 %v232, 0.0
    %v235 = vld [vmem:[#allocation8] sm:$0xff]
    %v236 = vld [vmem:[#allocation8 + $0x8] sm:$0xff]
    %v237 = vld [vmem:[#allocation8 + $0x10] sm:$0xff]
    %v238 = vld [vmem:[#allocation8 + $0x18] sm:$0xff]
    %v239 = vld [vmem:[#allocation8 + $0x20] sm:$0xff]
    %v240 = vld [vmem:[#allocation8 + $0x28] sm:$0xff]
    %v241 = vld [vmem:[#allocation8 + $0x30] sm:$0xff]
    %v242 = vld [vmem:[#allocation8 + $0x38] sm:$0xff]
    %v243 = vld [vmem:[#allocation8 + $0x40] sm:$0xff]
    %v244 = vld [vmem:[#allocation8 + $0x48] sm:$0xff]
    %v245 = vld [vmem:[#allocation8 + $0x50] sm:$0xff]
    %v246 = vld [vmem:[#allocation8 + $0x58] sm:$0xff]
    %v247 = vld [vmem:[#allocation8 + $0x60] sm:$0xff]
    %v248 = vld [vmem:[#allocation8 + $0x68] sm:$0xff]
    %v249 = vld [vmem:[#allocation8 + $0x70] sm:$0xff]
    %v250 = vld [vmem:[#allocation8 + $0x78] sm:$0xff]
    %v251 = vld [vmem:[#allocation10] sm:$0x1]
    %v253 = vperm.slane %v251, 0
    %255 = vmatpush.msra.mxu0 %v250
    %256 = vmatpush.msra.mxu0 %v249
    %257 = vmatpush.msra.mxu0 %v248
    %258 = vmatpush.msra.mxu0 %v247
    %259 = vmatpush.msra.mxu0 %v246
    %260 = vmatpush.msra.mxu0 %v245
    %261 = vmatpush.msra.mxu0 %v244
    %262 = vmatpush.msra.mxu0 %v243
    %263 = vmatpush.msra.mxu0 %v242
    %264 = vmatpush.msra.mxu0 %v241
    %265 = vmatpush.msra.mxu0 %v240
    %266 = vmatpush.msra.mxu0 %v239
    %267 = vmatpush.msra.mxu0 %v238
    %268 = vmatpush.msra.mxu0 %v237
    %269 = vmatpush.msra.mxu0 %v236
    %270 = vmatpush.msra.mxu0 %v235
    %271 = vmatmul.f32.gmra.mxu0 %v234
    %v272 = vpop.f32.mrf.mxu0
    %v273 = vadd.f32 %v253, %v272
    %274 = vdwg.mxu0
    %v275 = vmax.f32 %v273, 0.0
    %v276 = vld [vmem:[#allocation11] sm:$0xff]
    %v277 = vld [vmem:[#allocation11 + $0x8] sm:$0xff]
    %v278 = vld [vmem:[#allocation11 + $0x10] sm:$0xff]
    %v279 = vld [vmem:[#allocation11 + $0x18] sm:$0xff]
    %v280 = vld [vmem:[#allocation11 + $0x20] sm:$0xff]
    %v281 = vld [vmem:[#allocation11 + $0x28] sm:$0xff]
    %v282 = vld [vmem:[#allocation11 + $0x30] sm:$0xff]
    %v283 = vld [vmem:[#allocation11 + $0x38] sm:$0xff]
    %v284 = vld [vmem:[#allocation11 + $0x40] sm:$0xff]
    %v285 = vld [vmem:[#allocation11 + $0x48] sm:$0xff]
    %v286 = vld [vmem:[#allocation11 + $0x50] sm:$0xff]
    %v287 = vld [vmem:[#allocation11 + $0x58] sm:$0xff]
    %v288 = vld [vmem:[#allocation11 + $0x60] sm:$0xff]
    %v289 = vld [vmem:[#allocation11 + $0x68] sm:$0xff]
    %v290 = vld [vmem:[#allocation11 + $0x70] sm:$0xff]
    %v291 = vld [vmem:[#allocation11 + $0x78] sm:$0xff]
    %v292 = vld [vmem:[#allocation13] sm:$0x1]
    %v294 = vperm.slane %v292, 0
    %296 = vmatpush.msra.mxu0 %v291
    %297 = vmatpush.msra.mxu0 %v290
    %298 = vmatpush.msra.mxu0 %v289
    %299 = vmatpush.msra.mxu0 %v288
    %300 = vmatpush.msra.mxu0 %v287
    %301 = vmatpush.msra.mxu0 %v286
    %302 = vmatpush.msra.mxu0 %v285
    %303 = vmatpush.msra.mxu0 %v284
    %304 = vmatpush.msra.mxu0 %v283
    %305 = vmatpush.msra.mxu0 %v282
    %306 = vmatpush.msra.mxu0 %v281
    %307 = vmatpush.msra.mxu0 %v280
    %308 = vmatpush.msra.mxu0 %v279
    %309 = vmatpush.msra.mxu0 %v278
    %310 = vmatpush.msra.mxu0 %v277
    %311 = vmatpush.msra.mxu0 %v276
    %312 = vmatmul.f32.gmra.mxu0 %v275
    %v313 = vpop.f32.mrf.mxu0
    %v314 = vadd.f32 %v294, %v313
    %315 = vdwg.mxu0
    %v316 = vmax.f32 %v314, 0.0
    %v317 = vld [vmem:[#allocation14] sm:$0xff]
    %v318 = vld [vmem:[#allocation14 + $0x8] sm:$0xff]
    %v319 = vld [vmem:[#allocation14 + $0x10] sm:$0xff]
    %v320 = vld [vmem:[#allocation14 + $0x18] sm:$0xff]
    %v321 = vld [vmem:[#allocation14 + $0x20] sm:$0xff]
    %v322 = vld [vmem:[#allocation14 + $0x28] sm:$0xff]
    %v323 = vld [vmem:[#allocation14 + $0x30] sm:$0xff]
    %v324 = vld [vmem:[#allocation14 + $0x38] sm:$0xff]
    %v325 = vld [vmem:[#allocation14 + $0x40] sm:$0xff]
    %v326 = vld [vmem:[#allocation14 + $0x48] sm:$0xff]
    %v327 = vld [vmem:[#allocation14 + $0x50] sm:$0xff]
    %v328 = vld [vmem:[#allocation14 + $0x58] sm:$0xff]
    %v329 = vld [vmem:[#allocation14 + $0x60] sm:$0xff]
    %v330 = vld [vmem:[#allocation14 + $0x68] sm:$0xff]
    %v331 = vld [vmem:[#allocation14 + $0x70] sm:$0xff]
    %v332 = vld [vmem:[#allocation14 + $0x78] sm:$0xff]
    %v333 = vld [vmem:[%s8] sm:$0x1]
    %v335 = vperm.slane %v333, 0
    %337 = vmatpush.msra.mxu0 %v332
    %338 = vmatpush.msra.mxu0 %v331
    %339 = vmatpush.msra.mxu0 %v330
    %340 = vmatpush.msra.mxu0 %v329
    %341 = vmatpush.msra.mxu0 %v328
    %342 = vmatpush.msra.mxu0 %v327
    %343 = vmatpush.msra.mxu0 %v326
    %344 = vmatpush.msra.mxu0 %v325
    %345 = vmatpush.msra.mxu0 %v324
    %346 = vmatpush.msra.mxu0 %v323
    %347 = vmatpush.msra.mxu0 %v322
    %348 = vmatpush.msra.mxu0 %v321
    %349 = vmatpush.msra.mxu0 %v320
    %350 = vmatpush.msra.mxu0 %v319
    %351 = vmatpush.msra.mxu0 %v318
    %352 = vmatpush.msra.mxu0 %v317
    %353 = vmatmul.f32.gmra.mxu0 %v316
    %v354 = vpop.f32.mrf.mxu0
    %v355 = vadd.f32 %v335, %v354
    %356 = vdwg.mxu0
    %v357 = vmax.f32 %v355, 0.0
    %v358 = vld [vmem:[#allocation16] sm:$0xff]
    %v359 = vld [vmem:[#allocation16 + $0x8] sm:$0xff]
    %v360 = vld [vmem:[#allocation16 + $0x10] sm:$0xff]
    %v361 = vld [vmem:[#allocation16 + $0x18] sm:$0xff]
    %v362 = vld [vmem:[#allocation16 + $0x20] sm:$0xff]
    %v363 = vld [vmem:[#allocation16 + $0x28] sm:$0xff]
    %v364 = vld [vmem:[#allocation16 + $0x30] sm:$0xff]
    %v365 = vld [vmem:[#allocation16 + $0x38] sm:$0xff]
    %v366 = vld [vmem:[#allocation16 + $0x40] sm:$0xff]
    %v367 = vld [vmem:[#allocation16 + $0x48] sm:$0xff]
    %v368 = vld [vmem:[#allocation16 + $0x50] sm:$0xff]
    %v369 = vld [vmem:[#allocation16 + $0x58] sm:$0xff]
    %v370 = vld [vmem:[#allocation16 + $0x60] sm:$0xff]
    %v371 = vld [vmem:[#allocation16 + $0x68] sm:$0xff]
    %v372 = vld [vmem:[#allocation16 + $0x70] sm:$0xff]
    %v373 = vld [vmem:[#allocation16 + $0x78] sm:$0xff]
    %v374 = vld [vmem:[#allocation16 + $0x80] sm:$0xff]
    %v375 = vld [vmem:[#allocation16 + $0x88] sm:$0xff]
    %v376 = vld [vmem:[#allocation16 + $0x90] sm:$0xff]
    %v377 = vld [vmem:[#allocation16 + $0x98] sm:$0xff]
    %v378 = vld [vmem:[#allocation16 + $0xa0] sm:$0xff]
    %v379 = vld [vmem:[#allocation16 + $0xa8] sm:$0xff]
    %v380 = vld [vmem:[#allocation16 + $0xb0] sm:$0xff]
    %v381 = vld [vmem:[#allocation16 + $0xb8] sm:$0xff]
    %v382 = vld [vmem:[#allocation16 + $0xc0] sm:$0xff]
    %v383 = vld [vmem:[#allocation16 + $0xc8] sm:$0xff]
    %v384 = vld [vmem:[#allocation16 + $0xd0] sm:$0xff]
    %v385 = vld [vmem:[#allocation16 + $0xd8] sm:$0xff]
    %v386 = vld [vmem:[#allocation16 + $0xe0] sm:$0xff]
    %v387 = vld [vmem:[#allocation16 + $0xe8] sm:$0xff]
    %v388 = vld [vmem:[#allocation16 + $0xf0] sm:$0xff]
    %v389 = vld [vmem:[#allocation16 + $0xf8] sm:$0xff]
    %v390 = vld [vmem:[#allocation17] sm:$0x3]
    %v392 = vperm.slane %v390, 0
    %v393 = vperm.slane %v390, 1
    %396 = vmatpush.msra.mxu0 %v388
    %397 = vmatpush.msra.mxu0 %v386
    %398 = vmatpush.msra.mxu0 %v384
    %399 = vmatpush.msra.mxu0 %v382
    %400 = vmatpush.msra.mxu0 %v380
    %401 = vmatpush.msra.mxu0 %v378
    %402 = vmatpush.msra.mxu0 %v376
    %403 = vmatpush.msra.mxu0 %v374
    %404 = vmatpush.msra.mxu0 %v372
    %405 = vmatpush.msra.mxu0 %v370
    %406 = vmatpush.msra.mxu0 %v368
    %407 = vmatpush.msra.mxu0 %v366
    %408 = vmatpush.msra.mxu0 %v364
    %409 = vmatpush.msra.mxu0 %v362
    %410 = vmatpush.msra.mxu0 %v360
    %411 = vmatpush.msra.mxu0 %v358
    %412 = vmatmul.f32.gmra.mxu0 %v357
    %v413 = vpop.f32.mrf.mxu0
    %v414 = vadd.f32 %v392, %v413
    %415 = vdwg.mxu0
    %416 = vmatpush.msra.mxu0 %v389
    %417 = vmatpush.msra.mxu0 %v387
    %418 = vmatpush.msra.mxu0 %v385
    %419 = vmatpush.msra.mxu0 %v383
    %420 = vmatpush.msra.mxu0 %v381
    %421 = vmatpush.msra.mxu0 %v379
    %422 = vmatpush.msra.mxu0 %v377
    %423 = vmatpush.msra.mxu0 %v375
    %424 = vmatpush.msra.mxu0 %v373
    %425 = vmatpush.msra.mxu0 %v371
    %426 = vmatpush.msra.mxu0 %v369
    %427 = vmatpush.msra.mxu0 %v367
    %428 = vmatpush.msra.mxu0 %v365
    %429 = vmatpush.msra.mxu0 %v363
    %430 = vmatpush.msra.mxu0 %v361
    %431 = vmatpush.msra.mxu0 %v359
    %432 = vmatmul.f32.gmra.mxu0 %v357
    %v433 = vpop.f32.mrf.mxu0
    %v434 = vadd.f32 %v393, %v433
    %435 = vdwg.mxu0
    %v436 = vsub.f32 %v193, %v414
    %v437 = vadd.f32 %v434, 0.0
    %s438 = scalar_lea.vmem [#allocation5], 128
    %v439 = vld [vmem:[%s438] sm:$0xff]
    %v440 = vld [vmem:[%s438 + $0x8] sm:$0xff]
    %v441 = vld [vmem:[%s438 + $0x10] sm:$0xff]
    %v442 = vld [vmem:[%s438 + $0x18] sm:$0xff]
    %v443 = vld [vmem:[%s438 + $0x20] sm:$0xff]
    %v444 = vld [vmem:[%s438 + $0x28] sm:$0xff]
    %v445 = vld [vmem:[%s438 + $0x30] sm:$0xff]
    %v446 = vld [vmem:[%s438 + $0x38] sm:$0xff]
    %v447 = vld [vmem:[%s438 + $0x40] sm:$0xff]
    %v448 = vld [vmem:[%s438 + $0x48] sm:$0xff]
    %v449 = vld [vmem:[%s438 + $0x50] sm:$0xff]
    %v450 = vld [vmem:[%s438 + $0x58] sm:$0xff]
    %v451 = vld [vmem:[%s438 + $0x60] sm:$0xff]
    %v452 = vld [vmem:[%s438 + $0x68] sm:$0xff]
    %v453 = vld [vmem:[%s438 + $0x70] sm:$0xff]
    %v454 = vld [vmem:[%s438 + $0x78] sm:$0xff]
    %s455 = scalar_lea.vmem [#allocation7], 1
    %v456 = vld [vmem:[%s455] sm:$0x1]
    %v458 = vperm.slane %v456, 0
    %460 = vmatpush.msra.mxu0 %v454
    %461 = vmatpush.msra.mxu0 %v453
    %462 = vmatpush.msra.mxu0 %v452
    %463 = vmatpush.msra.mxu0 %v451
    %464 = vmatpush.msra.mxu0 %v450
    %465 = vmatpush.msra.mxu0 %v449
    %466 = vmatpush.msra.mxu0 %v448
    %467 = vmatpush.msra.mxu0 %v447
    %468 = vmatpush.msra.mxu0 %v446
    %469 = vmatpush.msra.mxu0 %v445
    %470 = vmatpush.msra.mxu0 %v444
    %471 = vmatpush.msra.mxu0 %v443
    %472 = vmatpush.msra.mxu0 %v442
    %473 = vmatpush.msra.mxu0 %v441
    %474 = vmatpush.msra.mxu0 %v440
    %475 = vmatpush.msra.mxu0 %v439
    %476 = vmatmul.f32.gmra.mxu0 %v436
    %v477 = vpop.f32.mrf.mxu0
    %v478 = vadd.f32 %v458, %v477
    %479 = vdwg.mxu0
    %v480 = vmax.f32 %v478, 0.0
    %s481 = scalar_lea.vmem [#allocation8], 128
    %v482 = vld [vmem:[%s481] sm:$0xff]
    %v483 = vld [vmem:[%s481 + $0x8] sm:$0xff]
    %v484 = vld [vmem:[%s481 + $0x10] sm:$0xff]
    %v485 = vld [vmem:[%s481 + $0x18] sm:$0xff]
    %v486 = vld [vmem:[%s481 + $0x20] sm:$0xff]
    %v487 = vld [vmem:[%s481 + $0x28] sm:$0xff]
    %v488 = vld [vmem:[%s481 + $0x30] sm:$0xff]
    %v489 = vld [vmem:[%s481 + $0x38] sm:$0xff]
    %v490 = vld [vmem:[%s481 + $0x40] sm:$0xff]
    %v491 = vld [vmem:[%s481 + $0x48] sm:$0xff]
    %v492 = vld [vmem:[%s481 + $0x50] sm:$0xff]
    %v493 = vld [vmem:[%s481 + $0x58] sm:$0xff]
    %v494 = vld [vmem:[%s481 + $0x60] sm:$0xff]
    %v495 = vld [vmem:[%s481 + $0x68] sm:$0xff]
    %v496 = vld [vmem:[%s481 + $0x70] sm:$0xff]
    %v497 = vld [vmem:[%s481 + $0x78] sm:$0xff]
    %s498 = scalar_lea.vmem [#allocation10], 1
    %v499 = vld [vmem:[%s498] sm:$0x1]
    %v501 = vperm.slane %v499, 0
    %503 = vmatpush.msra.mxu0 %v497
    %504 = vmatpush.msra.mxu0 %v496
    %505 = vmatpush.msra.mxu0 %v495
    %506 = vmatpush.msra.mxu0 %v494
    %507 = vmatpush.msra.mxu0 %v493
    %508 = vmatpush.msra.mxu0 %v492
    %509 = vmatpush.msra.mxu0 %v491
    %510 = vmatpush.msra.mxu0 %v490
    %511 = vmatpush.msra.mxu0 %v489
    %512 = vmatpush.msra.mxu0 %v488
    %513 = vmatpush.msra.mxu0 %v487
    %514 = vmatpush.msra.mxu0 %v486
    %515 = vmatpush.msra.mxu0 %v485
    %516 = vmatpush.msra.mxu0 %v484
    %517 = vmatpush.msra.mxu0 %v483
    %518 = vmatpush.msra.mxu0 %v482
    %519 = vmatmul.f32.gmra.mxu0 %v480
    %v520 = vpop.f32.mrf.mxu0
    %v521 = vadd.f32 %v501, %v520
    %522 = vdwg.mxu0
    %v523 = vmax.f32 %v521, 0.0
    %s524 = scalar_lea.vmem [#allocation11], 128
    %v525 = vld [vmem:[%s524] sm:$0xff]
    %v526 = vld [vmem:[%s524 + $0x8] sm:$0xff]
    %v527 = vld [vmem:[%s524 + $0x10] sm:$0xff]
    %v528 = vld [vmem:[%s524 + $0x18] sm:$0xff]
    %v529 = vld [vmem:[%s524 + $0x20] sm:$0xff]
    %v530 = vld [vmem:[%s524 + $0x28] sm:$0xff]
    %v531 = vld [vmem:[%s524 + $0x30] sm:$0xff]
    %v532 = vld [vmem:[%s524 + $0x38] sm:$0xff]
    %v533 = vld [vmem:[%s524 + $0x40] sm:$0xff]
    %v534 = vld [vmem:[%s524 + $0x48] sm:$0xff]
    %v535 = vld [vmem:[%s524 + $0x50] sm:$0xff]
    %v536 = vld [vmem:[%s524 + $0x58] sm:$0xff]
    %v537 = vld [vmem:[%s524 + $0x60] sm:$0xff]
    %v538 = vld [vmem:[%s524 + $0x68] sm:$0xff]
    %v539 = vld [vmem:[%s524 + $0x70] sm:$0xff]
    %v540 = vld [vmem:[%s524 + $0x78] sm:$0xff]
    %s541 = scalar_lea.vmem [#allocation13], 1
    %v542 = vld [vmem:[%s541] sm:$0x1]
    %v544 = vperm.slane %v542, 0
    %546 = vmatpush.msra.mxu0 %v540
    %547 = vmatpush.msra.mxu0 %v539
    %548 = vmatpush.msra.mxu0 %v538
    %549 = vmatpush.msra.mxu0 %v537
    %550 = vmatpush.msra.mxu0 %v536
    %551 = vmatpush.msra.mxu0 %v535
    %552 = vmatpush.msra.mxu0 %v534
    %553 = vmatpush.msra.mxu0 %v533
    %554 = vmatpush.msra.mxu0 %v532
    %555 = vmatpush.msra.mxu0 %v531
    %556 = vmatpush.msra.mxu0 %v530
    %557 = vmatpush.msra.mxu0 %v529
    %558 = vmatpush.msra.mxu0 %v528
    %559 = vmatpush.msra.mxu0 %v527
    %560 = vmatpush.msra.mxu0 %v526
    %561 = vmatpush.msra.mxu0 %v525
    %562 = vmatmul.f32.gmra.mxu0 %v523
    %v563 = vpop.f32.mrf.mxu0
    %v564 = vadd.f32 %v544, %v563
    %565 = vdwg.mxu0
    %v566 = vmax.f32 %v564, 0.0
    %s567 = scalar_lea.vmem [#allocation14], 128
    %v568 = vld [vmem:[%s567] sm:$0xff]
    %v569 = vld [vmem:[%s567 + $0x8] sm:$0xff]
    %v570 = vld [vmem:[%s567 + $0x10] sm:$0xff]
    %v571 = vld [vmem:[%s567 + $0x18] sm:$0xff]
    %v572 = vld [vmem:[%s567 + $0x20] sm:$0xff]
    %v573 = vld [vmem:[%s567 + $0x28] sm:$0xff]
    %v574 = vld [vmem:[%s567 + $0x30] sm:$0xff]
    %v575 = vld [vmem:[%s567 + $0x38] sm:$0xff]
    %v576 = vld [vmem:[%s567 + $0x40] sm:$0xff]
    %v577 = vld [vmem:[%s567 + $0x48] sm:$0xff]
    %v578 = vld [vmem:[%s567 + $0x50] sm:$0xff]
    %v579 = vld [vmem:[%s567 + $0x58] sm:$0xff]
    %v580 = vld [vmem:[%s567 + $0x60] sm:$0xff]
    %v581 = vld [vmem:[%s567 + $0x68] sm:$0xff]
    %v582 = vld [vmem:[%s567 + $0x70] sm:$0xff]
    %v583 = vld [vmem:[%s567 + $0x78] sm:$0xff]
    %s584 = scalar_lea.vmem %s8, 1
    %v585 = vld [vmem:[%s584] sm:$0x1]
    %v587 = vperm.slane %v585, 0
    %589 = vmatpush.msra.mxu0 %v583
    %590 = vmatpush.msra.mxu0 %v582
    %591 = vmatpush.msra.mxu0 %v581
    %592 = vmatpush.msra.mxu0 %v580
    %593 = vmatpush.msra.mxu0 %v579
    %594 = vmatpush.msra.mxu0 %v578
    %595 = vmatpush.msra.mxu0 %v577
    %596 = vmatpush.msra.mxu0 %v576
    %597 = vmatpush.msra.mxu0 %v575
    %598 = vmatpush.msra.mxu0 %v574
    %599 = vmatpush.msra.mxu0 %v573
    %600 = vmatpush.msra.mxu0 %v572
    %601 = vmatpush.msra.mxu0 %v571
    %602 = vmatpush.msra.mxu0 %v570
    %603 = vmatpush.msra.mxu0 %v569
    %604 = vmatpush.msra.mxu0 %v568
    %605 = vmatmul.f32.gmra.mxu0 %v566
    %v606 = vpop.f32.mrf.mxu0
    %v607 = vadd.f32 %v587, %v606
    %608 = vdwg.mxu0
    %v609 = vmax.f32 %v607, 0.0
    %s610 = scalar_lea.vmem [#allocation16], 256
    %v611 = vld [vmem:[%s610] sm:$0xff]
    %v612 = vld [vmem:[%s610 + $0x8] sm:$0xff]
    %v613 = vld [vmem:[%s610 + $0x10] sm:$0xff]
    %v614 = vld [vmem:[%s610 + $0x18] sm:$0xff]
    %v615 = vld [vmem:[%s610 + $0x20] sm:$0xff]
    %v616 = vld [vmem:[%s610 + $0x28] sm:$0xff]
    %v617 = vld [vmem:[%s610 + $0x30] sm:$0xff]
    %v618 = vld [vmem:[%s610 + $0x38] sm:$0xff]
    %v619 = vld [vmem:[%s610 + $0x40] sm:$0xff]
    %v620 = vld [vmem:[%s610 + $0x48] sm:$0xff]
    %v621 = vld [vmem:[%s610 + $0x50] sm:$0xff]
    %v622 = vld [vmem:[%s610 + $0x58] sm:$0xff]
    %v623 = vld [vmem:[%s610 + $0x60] sm:$0xff]
    %v624 = vld [vmem:[%s610 + $0x68] sm:$0xff]
    %v625 = vld [vmem:[%s610 + $0x70] sm:$0xff]
    %v626 = vld [vmem:[%s610 + $0x78] sm:$0xff]
    %v627 = vld [vmem:[%s610 + $0x80] sm:$0xff]
    %v628 = vld [vmem:[%s610 + $0x88] sm:$0xff]
    %v629 = vld [vmem:[%s610 + $0x90] sm:$0xff]
    %v630 = vld [vmem:[%s610 + $0x98] sm:$0xff]
    %v631 = vld [vmem:[%s610 + $0xa0] sm:$0xff]
    %v632 = vld [vmem:[%s610 + $0xa8] sm:$0xff]
    %v633 = vld [vmem:[%s610 + $0xb0] sm:$0xff]
    %v634 = vld [vmem:[%s610 + $0xb8] sm:$0xff]
    %v635 = vld [vmem:[%s610 + $0xc0] sm:$0xff]
    %v636 = vld [vmem:[%s610 + $0xc8] sm:$0xff]
    %v637 = vld [vmem:[%s610 + $0xd0] sm:$0xff]
    %v638 = vld [vmem:[%s610 + $0xd8] sm:$0xff]
    %v639 = vld [vmem:[%s610 + $0xe0] sm:$0xff]
    %v640 = vld [vmem:[%s610 + $0xe8] sm:$0xff]
    %v641 = vld [vmem:[%s610 + $0xf0] sm:$0xff]
    %v642 = vld [vmem:[%s610 + $0xf8] sm:$0xff]
    %s643 = scalar_lea.vmem [#allocation17], 2
    %v644 = vld [vmem:[%s643] sm:$0x3]
    %v646 = vperm.slane %v644, 0
    %v647 = vperm.slane %v644, 1
    %650 = vmatpush.msra.mxu0 %v641
    %651 = vmatpush.msra.mxu0 %v639
    %652 = vmatpush.msra.mxu0 %v637
    %653 = vmatpush.msra.mxu0 %v635
    %654 = vmatpush.msra.mxu0 %v633
    %655 = vmatpush.msra.mxu0 %v631
    %656 = vmatpush.msra.mxu0 %v629
    %657 = vmatpush.msra.mxu0 %v627
    %658 = vmatpush.msra.mxu0 %v625
    %659 = vmatpush.msra.mxu0 %v623
    %660 = vmatpush.msra.mxu0 %v621
    %661 = vmatpush.msra.mxu0 %v619
    %662 = vmatpush.msra.mxu0 %v617
    %663 = vmatpush.msra.mxu0 %v615
    %664 = vmatpush.msra.mxu0 %v613
    %665 = vmatpush.msra.mxu0 %v611
    %666 = vmatmul.f32.gmra.mxu0 %v609
    %v667 = vpop.f32.mrf.mxu0
    %v668 = vadd.f32 %v646, %v667
    %669 = vdwg.mxu0
    %670 = vmatpush.msra.mxu0 %v642
    %671 = vmatpush.msra.mxu0 %v640
    %672 = vmatpush.msra.mxu0 %v638
    %673 = vmatpush.msra.mxu0 %v636
    %674 = vmatpush.msra.mxu0 %v634
    %675 = vmatpush.msra.mxu0 %v632
    %676 = vmatpush.msra.mxu0 %v630
    %677 = vmatpush.msra.mxu0 %v628
    %678 = vmatpush.msra.mxu0 %v626
    %679 = vmatpush.msra.mxu0 %v624
    %680 = vmatpush.msra.mxu0 %v622
    %681 = vmatpush.msra.mxu0 %v620
    %682 = vmatpush.msra.mxu0 %v618
    %683 = vmatpush.msra.mxu0 %v616
    %684 = vmatpush.msra.mxu0 %v614
    %685 = vmatpush.msra.mxu0 %v612
    %686 = vmatmul.f32.gmra.mxu0 %v609
    %v687 = vpop.f32.mrf.mxu0
    %v688 = vadd.f32 %v647, %v687
    %689 = vdwg.mxu0
    %v690 = vsub.f32 %v436, %v668
    %v691 = vadd.f32 %v437, %v688
    %s692 = scalar_lea.vmem [#allocation5], 256
    %v693 = vld [vmem:[%s692] sm:$0xff]
    %v694 = vld [vmem:[%s692 + $0x8] sm:$0xff]
    %v695 = vld [vmem:[%s692 + $0x10] sm:$0xff]
    %v696 = vld [vmem:[%s692 + $0x18] sm:$0xff]
    %v697 = vld [vmem:[%s692 + $0x20] sm:$0xff]
    %v698 = vld [vmem:[%s692 + $0x28] sm:$0xff]
    %v699 = vld [vmem:[%s692 + $0x30] sm:$0xff]
    %v700 = vld [vmem:[%s692 + $0x38] sm:$0xff]
    %v701 = vld [vmem:[%s692 + $0x40] sm:$0xff]
    %v702 = vld [vmem:[%s692 + $0x48] sm:$0xff]
    %v703 = vld [vmem:[%s692 + $0x50] sm:$0xff]
    %v704 = vld [vmem:[%s692 + $0x58] sm:$0xff]
    %v705 = vld [vmem:[%s692 + $0x60] sm:$0xff]
    %v706 = vld [vmem:[%s692 + $0x68] sm:$0xff]
    %v707 = vld [vmem:[%s692 + $0x70] sm:$0xff]
    %v708 = vld [vmem:[%s692 + $0x78] sm:$0xff]
    %s709 = scalar_lea.vmem [#allocation7], 2
    %v710 = vld [vmem:[%s709] sm:$0x1]
    %v712 = vperm.slane %v710, 0
    %714 = vmatpush.msra.mxu0 %v708
    %715 = vmatpush.msra.mxu0 %v707
    %716 = vmatpush.msra.mxu0 %v706
    %717 = vmatpush.msra.mxu0 %v705
    %718 = vmatpush.msra.mxu0 %v704
    %719 = vmatpush.msra.mxu0 %v703
    %720 = vmatpush.msra.mxu0 %v702
    %721 = vmatpush.msra.mxu0 %v701
    %722 = vmatpush.msra.mxu0 %v700
    %723 = vmatpush.msra.mxu0 %v699
    %724 = vmatpush.msra.mxu0 %v698
    %725 = vmatpush.msra.mxu0 %v697
    %726 = vmatpush.msra.mxu0 %v696
    %727 = vmatpush.msra.mxu0 %v695
    %728 = vmatpush.msra.mxu0 %v694
    %729 = vmatpush.msra.mxu0 %v693
    %730 = vmatmul.f32.gmra.mxu0 %v690
    %v731 = vpop.f32.mrf.mxu0
    %v732 = vadd.f32 %v712, %v731
    %733 = vdwg.mxu0
    %v734 = vmax.f32 %v732, 0.0
    %s735 = scalar_lea.vmem [#allocation8], 256
    %v736 = vld [vmem:[%s735] sm:$0xff]
    %v737 = vld [vmem:[%s735 + $0x8] sm:$0xff]
    %v738 = vld [vmem:[%s735 + $0x10] sm:$0xff]
    %v739 = vld [vmem:[%s735 + $0x18] sm:$0xff]
    %v740 = vld [vmem:[%s735 + $0x20] sm:$0xff]
    %v741 = vld [vmem:[%s735 + $0x28] sm:$0xff]
    %v742 = vld [vmem:[%s735 + $0x30] sm:$0xff]
    %v743 = vld [vmem:[%s735 + $0x38] sm:$0xff]
    %v744 = vld [vmem:[%s735 + $0x40] sm:$0xff]
    %v745 = vld [vmem:[%s735 + $0x48] sm:$0xff]
    %v746 = vld [vmem:[%s735 + $0x50] sm:$0xff]
    %v747 = vld [vmem:[%s735 + $0x58] sm:$0xff]
    %v748 = vld [vmem:[%s735 + $0x60] sm:$0xff]
    %v749 = vld [vmem:[%s735 + $0x68] sm:$0xff]
    %v750 = vld [vmem:[%s735 + $0x70] sm:$0xff]
    %v751 = vld [vmem:[%s735 + $0x78] sm:$0xff]
    %s752 = scalar_lea.vmem [#allocation10], 2
    %v753 = vld [vmem:[%s752] sm:$0x1]
    %v755 = vperm.slane %v753, 0
    %757 = vmatpush.msra.mxu0 %v751
    %758 = vmatpush.msra.mxu0 %v750
    %759 = vmatpush.msra.mxu0 %v749
    %760 = vmatpush.msra.mxu0 %v748
    %761 = vmatpush.msra.mxu0 %v747
    %762 = vmatpush.msra.mxu0 %v746
    %763 = vmatpush.msra.mxu0 %v745
    %764 = vmatpush.msra.mxu0 %v744
    %765 = vmatpush.msra.mxu0 %v743
    %766 = vmatpush.msra.mxu0 %v742
    %767 = vmatpush.msra.mxu0 %v741
    %768 = vmatpush.msra.mxu0 %v740
    %769 = vmatpush.msra.mxu0 %v739
    %770 = vmatpush.msra.mxu0 %v738
    %771 = vmatpush.msra.mxu0 %v737
    %772 = vmatpush.msra.mxu0 %v736
    %773 = vmatmul.f32.gmra.mxu0 %v734
    %v774 = vpop.f32.mrf.mxu0
    %v775 = vadd.f32 %v755, %v774
    %776 = vdwg.mxu0
    %v777 = vmax.f32 %v775, 0.0
    %s778 = scalar_lea.vmem [#allocation11], 256
    %v779 = vld [vmem:[%s778] sm:$0xff]
    %v780 = vld [vmem:[%s778 + $0x8] sm:$0xff]
    %v781 = vld [vmem:[%s778 + $0x10] sm:$0xff]
    %v782 = vld [vmem:[%s778 + $0x18] sm:$0xff]
    %v783 = vld [vmem:[%s778 + $0x20] sm:$0xff]
    %v784 = vld [vmem:[%s778 + $0x28] sm:$0xff]
    %v785 = vld [vmem:[%s778 + $0x30] sm:$0xff]
    %v786 = vld [vmem:[%s778 + $0x38] sm:$0xff]
    %v787 = vld [vmem:[%s778 + $0x40] sm:$0xff]
    %v788 = vld [vmem:[%s778 + $0x48] sm:$0xff]
    %v789 = vld [vmem:[%s778 + $0x50] sm:$0xff]
    %v790 = vld [vmem:[%s778 + $0x58] sm:$0xff]
    %v791 = vld [vmem:[%s778 + $0x60] sm:$0xff]
    %v792 = vld [vmem:[%s778 + $0x68] sm:$0xff]
    %v793 = vld [vmem:[%s778 + $0x70] sm:$0xff]
    %v794 = vld [vmem:[%s778 + $0x78] sm:$0xff]
    %s795 = scalar_lea.vmem [#allocation13], 2
    %v796 = vld [vmem:[%s795] sm:$0x1]
    %v798 = vperm.slane %v796, 0
    %800 = vmatpush.msra.mxu0 %v794
    %801 = vmatpush.msra.mxu0 %v793
    %802 = vmatpush.msra.mxu0 %v792
    %803 = vmatpush.msra.mxu0 %v791
    %804 = vmatpush.msra.mxu0 %v790
    %805 = vmatpush.msra.mxu0 %v789
    %806 = vmatpush.msra.mxu0 %v788
    %807 = vmatpush.msra.mxu0 %v787
    %808 = vmatpush.msra.mxu0 %v786
    %809 = vmatpush.msra.mxu0 %v785
    %810 = vmatpush.msra.mxu0 %v784
    %811 = vmatpush.msra.mxu0 %v783
    %812 = vmatpush.msra.mxu0 %v782
    %813 = vmatpush.msra.mxu0 %v781
    %814 = vmatpush.msra.mxu0 %v780
    %815 = vmatpush.msra.mxu0 %v779
    %816 = vmatmul.f32.gmra.mxu0 %v777
    %v817 = vpop.f32.mrf.mxu0
    %v818 = vadd.f32 %v798, %v817
    %819 = vdwg.mxu0
    %v820 = vmax.f32 %v818, 0.0
    %s821 = scalar_lea.vmem [#allocation14], 256
    %v822 = vld [vmem:[%s821] sm:$0xff]
    %v823 = vld [vmem:[%s821 + $0x8] sm:$0xff]
    %v824 = vld [vmem:[%s821 + $0x10] sm:$0xff]
    %v825 = vld [vmem:[%s821 + $0x18] sm:$0xff]
    %v826 = vld [vmem:[%s821 + $0x20] sm:$0xff]
    %v827 = vld [vmem:[%s821 + $0x28] sm:$0xff]
    %v828 = vld [vmem:[%s821 + $0x30] sm:$0xff]
    %v829 = vld [vmem:[%s821 + $0x38] sm:$0xff]
    %v830 = vld [vmem:[%s821 + $0x40] sm:$0xff]
    %v831 = vld [vmem:[%s821 + $0x48] sm:$0xff]
    %v832 = vld [vmem:[%s821 + $0x50] sm:$0xff]
    %v833 = vld [vmem:[%s821 + $0x58] sm:$0xff]
    %v834 = vld [vmem:[%s821 + $0x60] sm:$0xff]
    %v835 = vld [vmem:[%s821 + $0x68] sm:$0xff]
    %v836 = vld [vmem:[%s821 + $0x70] sm:$0xff]
    %v837 = vld [vmem:[%s821 + $0x78] sm:$0xff]
    %s838 = scalar_lea.vmem %s8, 2
    %v839 = vld [vmem:[%s838] sm:$0x1]
    %v841 = vperm.slane %v839, 0
    %843 = vmatpush.msra.mxu0 %v837
    %844 = vmatpush.msra.mxu0 %v836
    %845 = vmatpush.msra.mxu0 %v835
    %846 = vmatpush.msra.mxu0 %v834
    %847 = vmatpush.msra.mxu0 %v833
    %848 = vmatpush.msra.mxu0 %v832
    %849 = vmatpush.msra.mxu0 %v831
    %850 = vmatpush.msra.mxu0 %v830
    %851 = vmatpush.msra.mxu0 %v829
    %852 = vmatpush.msra.mxu0 %v828
    %853 = vmatpush.msra.mxu0 %v827
    %854 = vmatpush.msra.mxu0 %v826
    %855 = vmatpush.msra.mxu0 %v825
    %856 = vmatpush.msra.mxu0 %v824
    %857 = vmatpush.msra.mxu0 %v823
    %858 = vmatpush.msra.mxu0 %v822
    %859 = vmatmul.f32.gmra.mxu0 %v820
    %v860 = vpop.f32.mrf.mxu0
    %v861 = vadd.f32 %v841, %v860
    %862 = vdwg.mxu0
    %v863 = vmax.f32 %v861, 0.0
    %s864 = scalar_lea.vmem [#allocation16], 512
    %v865 = vld [vmem:[%s864] sm:$0xff]
    %v866 = vld [vmem:[%s864 + $0x8] sm:$0xff]
    %v867 = vld [vmem:[%s864 + $0x10] sm:$0xff]
    %v868 = vld [vmem:[%s864 + $0x18] sm:$0xff]
    %v869 = vld [vmem:[%s864 + $0x20] sm:$0xff]
    %v870 = vld [vmem:[%s864 + $0x28] sm:$0xff]
    %v871 = vld [vmem:[%s864 + $0x30] sm:$0xff]
    %v872 = vld [vmem:[%s864 + $0x38] sm:$0xff]
    %v873 = vld [vmem:[%s864 + $0x40] sm:$0xff]
    %v874 = vld [vmem:[%s864 + $0x48] sm:$0xff]
    %v875 = vld [vmem:[%s864 + $0x50] sm:$0xff]
    %v876 = vld [vmem:[%s864 + $0x58] sm:$0xff]
    %v877 = vld [vmem:[%s864 + $0x60] sm:$0xff]
    %v878 = vld [vmem:[%s864 + $0x68] sm:$0xff]
    %v879 = vld [vmem:[%s864 + $0x70] sm:$0xff]
    %v880 = vld [vmem:[%s864 + $0x78] sm:$0xff]
    %v881 = vld [vmem:[%s864 + $0x80] sm:$0xff]
    %v882 = vld [vmem:[%s864 + $0x88] sm:$0xff]
    %v883 = vld [vmem:[%s864 + $0x90] sm:$0xff]
    %v884 = vld [vmem:[%s864 + $0x98] sm:$0xff]
    %v885 = vld [vmem:[%s864 + $0xa0] sm:$0xff]
    %v886 = vld [vmem:[%s864 + $0xa8] sm:$0xff]
    %v887 = vld [vmem:[%s864 + $0xb0] sm:$0xff]
    %v888 = vld [vmem:[%s864 + $0xb8] sm:$0xff]
    %v889 = vld [vmem:[%s864 + $0xc0] sm:$0xff]
    %v890 = vld [vmem:[%s864 + $0xc8] sm:$0xff]
    %v891 = vld [vmem:[%s864 + $0xd0] sm:$0xff]
    %v892 = vld [vmem:[%s864 + $0xd8] sm:$0xff]
    %v893 = vld [vmem:[%s864 + $0xe0] sm:$0xff]
    %v894 = vld [vmem:[%s864 + $0xe8] sm:$0xff]
    %v895 = vld [vmem:[%s864 + $0xf0] sm:$0xff]
    %v896 = vld [vmem:[%s864 + $0xf8] sm:$0xff]
    %s897 = scalar_lea.vmem [#allocation17], 4
    %v898 = vld [vmem:[%s897] sm:$0x3]
    %v900 = vperm.slane %v898, 0
    %v901 = vperm.slane %v898, 1
    %904 = vmatpush.msra.mxu0 %v895
    %905 = vmatpush.msra.mxu0 %v893
    %906 = vmatpush.msra.mxu0 %v891
    %907 = vmatpush.msra.mxu0 %v889
    %908 = vmatpush.msra.mxu0 %v887
    %909 = vmatpush.msra.mxu0 %v885
    %910 = vmatpush.msra.mxu0 %v883
    %911 = vmatpush.msra.mxu0 %v881
    %912 = vmatpush.msra.mxu0 %v879
    %913 = vmatpush.msra.mxu0 %v877
    %914 = vmatpush.msra.mxu0 %v875
    %915 = vmatpush.msra.mxu0 %v873
    %916 = vmatpush.msra.mxu0 %v871
    %917 = vmatpush.msra.mxu0 %v869
    %918 = vmatpush.msra.mxu0 %v867
    %919 = vmatpush.msra.mxu0 %v865
    %920 = vmatmul.f32.gmra.mxu0 %v863
    %v921 = vpop.f32.mrf.mxu0
    %v922 = vadd.f32 %v900, %v921
    %923 = vdwg.mxu0
    %924 = vmatpush.msra.mxu0 %v896
    %925 = vmatpush.msra.mxu0 %v894
    %926 = vmatpush.msra.mxu0 %v892
    %927 = vmatpush.msra.mxu0 %v890
    %928 = vmatpush.msra.mxu0 %v888
    %929 = vmatpush.msra.mxu0 %v886
    %930 = vmatpush.msra.mxu0 %v884
    %931 = vmatpush.msra.mxu0 %v882
    %932 = vmatpush.msra.mxu0 %v880
    %933 = vmatpush.msra.mxu0 %v878
    %934 = vmatpush.msra.mxu0 %v876
    %935 = vmatpush.msra.mxu0 %v874
    %936 = vmatpush.msra.mxu0 %v872
    %937 = vmatpush.msra.mxu0 %v870
    %938 = vmatpush.msra.mxu0 %v868
    %939 = vmatpush.msra.mxu0 %v866
    %940 = vmatmul.f32.gmra.mxu0 %v863
    %v941 = vpop.f32.mrf.mxu0
    %v942 = vadd.f32 %v901, %v941
    %943 = vdwg.mxu0
    %v944 = vsub.f32 %v690, %v922
    %v945 = vadd.f32 %v691, %v942
    %s946 = scalar_lea.vmem [#allocation5], 384
    %v947 = vld [vmem:[%s946] sm:$0xff]
    %v948 = vld [vmem:[%s946 + $0x8] sm:$0xff]
    %v949 = vld [vmem:[%s946 + $0x10] sm:$0xff]
    %v950 = vld [vmem:[%s946 + $0x18] sm:$0xff]
    %v951 = vld [vmem:[%s946 + $0x20] sm:$0xff]
    %v952 = vld [vmem:[%s946 + $0x28] sm:$0xff]
    %v953 = vld [vmem:[%s946 + $0x30] sm:$0xff]
    %v954 = vld [vmem:[%s946 + $0x38] sm:$0xff]
    %v955 = vld [vmem:[%s946 + $0x40] sm:$0xff]
    %v956 = vld [vmem:[%s946 + $0x48] sm:$0xff]
    %v957 = vld [vmem:[%s946 + $0x50] sm:$0xff]
    %v958 = vld [vmem:[%s946 + $0x58] sm:$0xff]
    %v959 = vld [vmem:[%s946 + $0x60] sm:$0xff]
    %v960 = vld [vmem:[%s946 + $0x68] sm:$0xff]
    %v961 = vld [vmem:[%s946 + $0x70] sm:$0xff]
    %v962 = vld [vmem:[%s946 + $0x78] sm:$0xff]
    %s963 = scalar_lea.vmem [#allocation7], 3
    %v964 = vld [vmem:[%s963] sm:$0x1]
    %v966 = vperm.slane %v964, 0
    %968 = vmatpush.msra.mxu0 %v962
    %969 = vmatpush.msra.mxu0 %v961
    %970 = vmatpush.msra.mxu0 %v960
    %971 = vmatpush.msra.mxu0 %v959
    %972 = vmatpush.msra.mxu0 %v958
    %973 = vmatpush.msra.mxu0 %v957
    %974 = vmatpush.msra.mxu0 %v956
    %975 = vmatpush.msra.mxu0 %v955
    %976 = vmatpush.msra.mxu0 %v954
    %977 = vmatpush.msra.mxu0 %v953
    %978 = vmatpush.msra.mxu0 %v952
    %979 = vmatpush.msra.mxu0 %v951
    %980 = vmatpush.msra.mxu0 %v950
    %981 = vmatpush.msra.mxu0 %v949
    %982 = vmatpush.msra.mxu0 %v948
    %983 = vmatpush.msra.mxu0 %v947
    %984 = vmatmul.f32.gmra.mxu0 %v944
    %v985 = vpop.f32.mrf.mxu0
    %v986 = vadd.f32 %v966, %v985
    %987 = vdwg.mxu0
    %v988 = vmax.f32 %v986, 0.0
    %s989 = scalar_lea.vmem [#allocation8], 384
    %v990 = vld [vmem:[%s989] sm:$0xff]
    %v991 = vld [vmem:[%s989 + $0x8] sm:$0xff]
    %v992 = vld [vmem:[%s989 + $0x10] sm:$0xff]
    %v993 = vld [vmem:[%s989 + $0x18] sm:$0xff]
    %v994 = vld [vmem:[%s989 + $0x20] sm:$0xff]
    %v995 = vld [vmem:[%s989 + $0x28] sm:$0xff]
    %v996 = vld [vmem:[%s989 + $0x30] sm:$0xff]
    %v997 = vld [vmem:[%s989 + $0x38] sm:$0xff]
    %v998 = vld [vmem:[%s989 + $0x40] sm:$0xff]
    %v999 = vld [vmem:[%s989 + $0x48] sm:$0xff]
    %v1000 = vld [vmem:[%s989 + $0x50] sm:$0xff]
    %v1001 = vld [vmem:[%s989 + $0x58] sm:$0xff]
    %v1002 = vld [vmem:[%s989 + $0x60] sm:$0xff]
    %v1003 = vld [vmem:[%s989 + $0x68] sm:$0xff]
    %v1004 = vld [vmem:[%s989 + $0x70] sm:$0xff]
    %v1005 = vld [vmem:[%s989 + $0x78] sm:$0xff]
    %s1006 = scalar_lea.vmem [#allocation10], 3
    %v1007 = vld [vmem:[%s1006] sm:$0x1]
    %v1009 = vperm.slane %v1007, 0
    %1011 = vmatpush.msra.mxu0 %v1005
    %1012 = vmatpush.msra.mxu0 %v1004
    %1013 = vmatpush.msra.mxu0 %v1003
    %1014 = vmatpush.msra.mxu0 %v1002
    %1015 = vmatpush.msra.mxu0 %v1001
    %1016 = vmatpush.msra.mxu0 %v1000
    %1017 = vmatpush.msra.mxu0 %v999
    %1018 = vmatpush.msra.mxu0 %v998
    %1019 = vmatpush.msra.mxu0 %v997
    %1020 = vmatpush.msra.mxu0 %v996
    %1021 = vmatpush.msra.mxu0 %v995
    %1022 = vmatpush.msra.mxu0 %v994
    %1023 = vmatpush.msra.mxu0 %v993
    %1024 = vmatpush.msra.mxu0 %v992
    %1025 = vmatpush.msra.mxu0 %v991
    %1026 = vmatpush.msra.mxu0 %v990
    %1027 = vmatmul.f32.gmra.mxu0 %v988
    %v1028 = vpop.f32.mrf.mxu0
    %v1029 = vadd.f32 %v1009, %v1028
    %1030 = vdwg.mxu0
    %v1031 = vmax.f32 %v1029, 0.0
    %s1032 = scalar_lea.vmem [#allocation11], 384
    %v1033 = vld [vmem:[%s1032] sm:$0xff]
    %v1034 = vld [vmem:[%s1032 + $0x8] sm:$0xff]
    %v1035 = vld [vmem:[%s1032 + $0x10] sm:$0xff]
    %v1036 = vld [vmem:[%s1032 + $0x18] sm:$0xff]
    %v1037 = vld [vmem:[%s1032 + $0x20] sm:$0xff]
    %v1038 = vld [vmem:[%s1032 + $0x28] sm:$0xff]
    %v1039 = vld [vmem:[%s1032 + $0x30] sm:$0xff]
    %v1040 = vld [vmem:[%s1032 + $0x38] sm:$0xff]
    %v1041 = vld [vmem:[%s1032 + $0x40] sm:$0xff]
    %v1042 = vld [vmem:[%s1032 + $0x48] sm:$0xff]
    %v1043 = vld [vmem:[%s1032 + $0x50] sm:$0xff]
    %v1044 = vld [vmem:[%s1032 + $0x58] sm:$0xff]
    %v1045 = vld [vmem:[%s1032 + $0x60] sm:$0xff]
    %v1046 = vld [vmem:[%s1032 + $0x68] sm:$0xff]
    %v1047 = vld [vmem:[%s1032 + $0x70] sm:$0xff]
    %v1048 = vld [vmem:[%s1032 + $0x78] sm:$0xff]
    %s1049 = scalar_lea.vmem [#allocation13], 3
    %v1050 = vld [vmem:[%s1049] sm:$0x1]
    %v1052 = vperm.slane %v1050, 0
    %1054 = vmatpush.msra.mxu0 %v1048
    %1055 = vmatpush.msra.mxu0 %v1047
    %1056 = vmatpush.msra.mxu0 %v1046
    %1057 = vmatpush.msra.mxu0 %v1045
    %1058 = vmatpush.msra.mxu0 %v1044
    %1059 = vmatpush.msra.mxu0 %v1043
    %1060 = vmatpush.msra.mxu0 %v1042
    %1061 = vmatpush.msra.mxu0 %v1041
    %1062 = vmatpush.msra.mxu0 %v1040
    %1063 = vmatpush.msra.mxu0 %v1039
    %1064 = vmatpush.msra.mxu0 %v1038
    %1065 = vmatpush.msra.mxu0 %v1037
    %1066 = vmatpush.msra.mxu0 %v1036
    %1067 = vmatpush.msra.mxu0 %v1035
    %1068 = vmatpush.msra.mxu0 %v1034
    %1069 = vmatpush.msra.mxu0 %v1033
    %1070 = vmatmul.f32.gmra.mxu0 %v1031
    %v1071 = vpop.f32.mrf.mxu0
    %v1072 = vadd.f32 %v1052, %v1071
    %1073 = vdwg.mxu0
    %v1074 = vmax.f32 %v1072, 0.0
    %s1075 = scalar_lea.vmem [#allocation14], 384
    %v1076 = vld [vmem:[%s1075] sm:$0xff]
    %v1077 = vld [vmem:[%s1075 + $0x8] sm:$0xff]
    %v1078 = vld [vmem:[%s1075 + $0x10] sm:$0xff]
    %v1079 = vld [vmem:[%s1075 + $0x18] sm:$0xff]
    %v1080 = vld [vmem:[%s1075 + $0x20] sm:$0xff]
    %v1081 = vld [vmem:[%s1075 + $0x28] sm:$0xff]
    %v1082 = vld [vmem:[%s1075 + $0x30] sm:$0xff]
    %v1083 = vld [vmem:[%s1075 + $0x38] sm:$0xff]
    %v1084 = vld [vmem:[%s1075 + $0x40] sm:$0xff]
    %v1085 = vld [vmem:[%s1075 + $0x48] sm:$0xff]
    %v1086 = vld [vmem:[%s1075 + $0x50] sm:$0xff]
    %v1087 = vld [vmem:[%s1075 + $0x58] sm:$0xff]
    %v1088 = vld [vmem:[%s1075 + $0x60] sm:$0xff]
    %v1089 = vld [vmem:[%s1075 + $0x68] sm:$0xff]
    %v1090 = vld [vmem:[%s1075 + $0x70] sm:$0xff]
    %v1091 = vld [vmem:[%s1075 + $0x78] sm:$0xff]
    %s1092 = scalar_lea.vmem %s8, 3
    %v1093 = vld [vmem:[%s1092] sm:$0x1]
    %v1095 = vperm.slane %v1093, 0
    %1097 = vmatpush.msra.mxu0 %v1091
    %1098 = vmatpush.msra.mxu0 %v1090
    %1099 = vmatpush.msra.mxu0 %v1089
    %1100 = vmatpush.msra.mxu0 %v1088
    %1101 = vmatpush.msra.mxu0 %v1087
    %1102 = vmatpush.msra.mxu0 %v1086
    %1103 = vmatpush.msra.mxu0 %v1085
    %1104 = vmatpush.msra.mxu0 %v1084
    %1105 = vmatpush.msra.mxu0 %v1083
    %1106 = vmatpush.msra.mxu0 %v1082
    %1107 = vmatpush.msra.mxu0 %v1081
    %1108 = vmatpush.msra.mxu0 %v1080
    %1109 = vmatpush.msra.mxu0 %v1079
    %1110 = vmatpush.msra.mxu0 %v1078
    %1111 = vmatpush.msra.mxu0 %v1077
    %1112 = vmatpush.msra.mxu0 %v1076
    %1113 = vmatmul.f32.gmra.mxu0 %v1074
    %v1114 = vpop.f32.mrf.mxu0
    %v1115 = vadd.f32 %v1095, %v1114
    %1116 = vdwg.mxu0
    %v1117 = vmax.f32 %v1115, 0.0
    %s1118 = scalar_lea.vmem [#allocation16], 768
    %v1119 = vld [vmem:[%s1118] sm:$0xff]
    %v1120 = vld [vmem:[%s1118 + $0x8] sm:$0xff]
    %v1121 = vld [vmem:[%s1118 + $0x10] sm:$0xff]
    %v1122 = vld [vmem:[%s1118 + $0x18] sm:$0xff]
    %v1123 = vld [vmem:[%s1118 + $0x20] sm:$0xff]
    %v1124 = vld [vmem:[%s1118 + $0x28] sm:$0xff]
    %v1125 = vld [vmem:[%s1118 + $0x30] sm:$0xff]
    %v1126 = vld [vmem:[%s1118 + $0x38] sm:$0xff]
    %v1127 = vld [vmem:[%s1118 + $0x40] sm:$0xff]
    %v1128 = vld [vmem:[%s1118 + $0x48] sm:$0xff]
    %v1129 = vld [vmem:[%s1118 + $0x50] sm:$0xff]
    %v1130 = vld [vmem:[%s1118 + $0x58] sm:$0xff]
    %v1131 = vld [vmem:[%s1118 + $0x60] sm:$0xff]
    %v1132 = vld [vmem:[%s1118 + $0x68] sm:$0xff]
    %v1133 = vld [vmem:[%s1118 + $0x70] sm:$0xff]
    %v1134 = vld [vmem:[%s1118 + $0x78] sm:$0xff]
    %v1135 = vld [vmem:[%s1118 + $0x80] sm:$0xff]
    %v1136 = vld [vmem:[%s1118 + $0x88] sm:$0xff]
    %v1137 = vld [vmem:[%s1118 + $0x90] sm:$0xff]
    %v1138 = vld [vmem:[%s1118 + $0x98] sm:$0xff]
    %v1139 = vld [vmem:[%s1118 + $0xa0] sm:$0xff]
    %v1140 = vld [vmem:[%s1118 + $0xa8] sm:$0xff]
    %v1141 = vld [vmem:[%s1118 + $0xb0] sm:$0xff]
    %v1142 = vld [vmem:[%s1118 + $0xb8] sm:$0xff]
    %v1143 = vld [vmem:[%s1118 + $0xc0] sm:$0xff]
    %v1144 = vld [vmem:[%s1118 + $0xc8] sm:$0xff]
    %v1145 = vld [vmem:[%s1118 + $0xd0] sm:$0xff]
    %v1146 = vld [vmem:[%s1118 + $0xd8] sm:$0xff]
    %v1147 = vld [vmem:[%s1118 + $0xe0] sm:$0xff]
    %v1148 = vld [vmem:[%s1118 + $0xe8] sm:$0xff]
    %v1149 = vld [vmem:[%s1118 + $0xf0] sm:$0xff]
    %v1150 = vld [vmem:[%s1118 + $0xf8] sm:$0xff]
    %s1151 = scalar_lea.vmem [#allocation17], 6
    %v1152 = vld [vmem:[%s1151] sm:$0x3]
    %v1154 = vperm.slane %v1152, 0
    %v1155 = vperm.slane %v1152, 1
    %1158 = vmatpush.msra.mxu0 %v1149
    %1159 = vmatpush.msra.mxu0 %v1147
    %1160 = vmatpush.msra.mxu0 %v1145
    %1161 = vmatpush.msra.mxu0 %v1143
    %1162 = vmatpush.msra.mxu0 %v1141
    %1163 = vmatpush.msra.mxu0 %v1139
    %1164 = vmatpush.msra.mxu0 %v1137
    %1165 = vmatpush.msra.mxu0 %v1135
    %1166 = vmatpush.msra.mxu0 %v1133
    %1167 = vmatpush.msra.mxu0 %v1131
    %1168 = vmatpush.msra.mxu0 %v1129
    %1169 = vmatpush.msra.mxu0 %v1127
    %1170 = vmatpush.msra.mxu0 %v1125
    %1171 = vmatpush.msra.mxu0 %v1123
    %1172 = vmatpush.msra.mxu0 %v1121
    %1173 = vmatpush.msra.mxu0 %v1119
    %1174 = vmatmul.f32.gmra.mxu0 %v1117
    %v1175 = vpop.f32.mrf.mxu0
    %v1176 = vadd.f32 %v1154, %v1175
    %1177 = vdwg.mxu0
    %1178 = vmatpush.msra.mxu0 %v1150
    %1179 = vmatpush.msra.mxu0 %v1148
    %1180 = vmatpush.msra.mxu0 %v1146
    %1181 = vmatpush.msra.mxu0 %v1144
    %1182 = vmatpush.msra.mxu0 %v1142
    %1183 = vmatpush.msra.mxu0 %v1140
    %1184 = vmatpush.msra.mxu0 %v1138
    %1185 = vmatpush.msra.mxu0 %v1136
    %1186 = vmatpush.msra.mxu0 %v1134
    %1187 = vmatpush.msra.mxu0 %v1132
    %1188 = vmatpush.msra.mxu0 %v1130
    %1189 = vmatpush.msra.mxu0 %v1128
    %1190 = vmatpush.msra.mxu0 %v1126
    %1191 = vmatpush.msra.mxu0 %v1124
    %1192 = vmatpush.msra.mxu0 %v1122
    %1193 = vmatpush.msra.mxu0 %v1120
    %1194 = vmatmul.f32.gmra.mxu0 %v1117
    %v1195 = vpop.f32.mrf.mxu0
    %v1196 = vadd.f32 %v1155, %v1195
    %1197 = vdwg.mxu0
    %v1198 = vsub.f32 %v944, %v1176
    %v1199 = vadd.f32 %v945, %v1196
    %s1200 = scalar_lea.vmem [#allocation5], 512
    %v1201 = vld [vmem:[%s1200] sm:$0xff]
    %v1202 = vld [vmem:[%s1200 + $0x8] sm:$0xff]
    %v1203 = vld [vmem:[%s1200 + $0x10] sm:$0xff]
    %v1204 = vld [vmem:[%s1200 + $0x18] sm:$0xff]
    %v1205 = vld [vmem:[%s1200 + $0x20] sm:$0xff]
    %v1206 = vld [vmem:[%s1200 + $0x28] sm:$0xff]
    %v1207 = vld [vmem:[%s1200 + $0x30] sm:$0xff]
    %v1208 = vld [vmem:[%s1200 + $0x38] sm:$0xff]
    %v1209 = vld [vmem:[%s1200 + $0x40] sm:$0xff]
    %v1210 = vld [vmem:[%s1200 + $0x48] sm:$0xff]
    %v1211 = vld [vmem:[%s1200 + $0x50] sm:$0xff]
    %v1212 = vld [vmem:[%s1200 + $0x58] sm:$0xff]
    %v1213 = vld [vmem:[%s1200 + $0x60] sm:$0xff]
    %v1214 = vld [vmem:[%s1200 + $0x68] sm:$0xff]
    %v1215 = vld [vmem:[%s1200 + $0x70] sm:$0xff]
    %v1216 = vld [vmem:[%s1200 + $0x78] sm:$0xff]
    %s1217 = scalar_lea.vmem [#allocation7], 4
    %v1218 = vld [vmem:[%s1217] sm:$0x1]
    %v1220 = vperm.slane %v1218, 0
    %1222 = vmatpush.msra.mxu0 %v1216
    %1223 = vmatpush.msra.mxu0 %v1215
    %1224 = vmatpush.msra.mxu0 %v1214
    %1225 = vmatpush.msra.mxu0 %v1213
    %1226 = vmatpush.msra.mxu0 %v1212
    %1227 = vmatpush.msra.mxu0 %v1211
    %1228 = vmatpush.msra.mxu0 %v1210
    %1229 = vmatpush.msra.mxu0 %v1209
    %1230 = vmatpush.msra.mxu0 %v1208
    %1231 = vmatpush.msra.mxu0 %v1207
    %1232 = vmatpush.msra.mxu0 %v1206
    %1233 = vmatpush.msra.mxu0 %v1205
    %1234 = vmatpush.msra.mxu0 %v1204
    %1235 = vmatpush.msra.mxu0 %v1203
    %1236 = vmatpush.msra.mxu0 %v1202
    %1237 = vmatpush.msra.mxu0 %v1201
    %1238 = vmatmul.f32.gmra.mxu0 %v1198
    %v1239 = vpop.f32.mrf.mxu0
    %v1240 = vadd.f32 %v1220, %v1239
    %1241 = vdwg.mxu0
    %v1242 = vmax.f32 %v1240, 0.0
    %s1243 = scalar_lea.vmem [#allocation8], 512
    %v1244 = vld [vmem:[%s1243] sm:$0xff]
    %v1245 = vld [vmem:[%s1243 + $0x8] sm:$0xff]
    %v1246 = vld [vmem:[%s1243 + $0x10] sm:$0xff]
    %v1247 = vld [vmem:[%s1243 + $0x18] sm:$0xff]
    %v1248 = vld [vmem:[%s1243 + $0x20] sm:$0xff]
    %v1249 = vld [vmem:[%s1243 + $0x28] sm:$0xff]
    %v1250 = vld [vmem:[%s1243 + $0x30] sm:$0xff]
    %v1251 = vld [vmem:[%s1243 + $0x38] sm:$0xff]
    %v1252 = vld [vmem:[%s1243 + $0x40] sm:$0xff]
    %v1253 = vld [vmem:[%s1243 + $0x48] sm:$0xff]
    %v1254 = vld [vmem:[%s1243 + $0x50] sm:$0xff]
    %v1255 = vld [vmem:[%s1243 + $0x58] sm:$0xff]
    %v1256 = vld [vmem:[%s1243 + $0x60] sm:$0xff]
    %v1257 = vld [vmem:[%s1243 + $0x68] sm:$0xff]
    %v1258 = vld [vmem:[%s1243 + $0x70] sm:$0xff]
    %v1259 = vld [vmem:[%s1243 + $0x78] sm:$0xff]
    %s1260 = scalar_lea.vmem [#allocation10], 4
    %v1261 = vld [vmem:[%s1260] sm:$0x1]
    %v1263 = vperm.slane %v1261, 0
    %1265 = vmatpush.msra.mxu0 %v1259
    %1266 = vmatpush.msra.mxu0 %v1258
    %1267 = vmatpush.msra.mxu0 %v1257
    %1268 = vmatpush.msra.mxu0 %v1256
    %1269 = vmatpush.msra.mxu0 %v1255
    %1270 = vmatpush.msra.mxu0 %v1254
    %1271 = vmatpush.msra.mxu0 %v1253
    %1272 = vmatpush.msra.mxu0 %v1252
    %1273 = vmatpush.msra.mxu0 %v1251
    %1274 = vmatpush.msra.mxu0 %v1250
    %1275 = vmatpush.msra.mxu0 %v1249
    %1276 = vmatpush.msra.mxu0 %v1248
    %1277 = vmatpush.msra.mxu0 %v1247
    %1278 = vmatpush.msra.mxu0 %v1246
    %1279 = vmatpush.msra.mxu0 %v1245
    %1280 = vmatpush.msra.mxu0 %v1244
    %1281 = vmatmul.f32.gmra.mxu0 %v1242
    %v1282 = vpop.f32.mrf.mxu0
    %v1283 = vadd.f32 %v1263, %v1282
    %1284 = vdwg.mxu0
    %v1285 = vmax.f32 %v1283, 0.0
    %s1286 = scalar_lea.vmem [#allocation11], 512
    %v1287 = vld [vmem:[%s1286] sm:$0xff]
    %v1288 = vld [vmem:[%s1286 + $0x8] sm:$0xff]
    %v1289 = vld [vmem:[%s1286 + $0x10] sm:$0xff]
    %v1290 = vld [vmem:[%s1286 + $0x18] sm:$0xff]
    %v1291 = vld [vmem:[%s1286 + $0x20] sm:$0xff]
    %v1292 = vld [vmem:[%s1286 + $0x28] sm:$0xff]
    %v1293 = vld [vmem:[%s1286 + $0x30] sm:$0xff]
    %v1294 = vld [vmem:[%s1286 + $0x38] sm:$0xff]
    %v1295 = vld [vmem:[%s1286 + $0x40] sm:$0xff]
    %v1296 = vld [vmem:[%s1286 + $0x48] sm:$0xff]
    %v1297 = vld [vmem:[%s1286 + $0x50] sm:$0xff]
    %v1298 = vld [vmem:[%s1286 + $0x58] sm:$0xff]
    %v1299 = vld [vmem:[%s1286 + $0x60] sm:$0xff]
    %v1300 = vld [vmem:[%s1286 + $0x68] sm:$0xff]
    %v1301 = vld [vmem:[%s1286 + $0x70] sm:$0xff]
    %v1302 = vld [vmem:[%s1286 + $0x78] sm:$0xff]
    %s1303 = scalar_lea.vmem [#allocation13], 4
    %v1304 = vld [vmem:[%s1303] sm:$0x1]
    %v1306 = vperm.slane %v1304, 0
    %1308 = vmatpush.msra.mxu0 %v1302
    %1309 = vmatpush.msra.mxu0 %v1301
    %1310 = vmatpush.msra.mxu0 %v1300
    %1311 = vmatpush.msra.mxu0 %v1299
    %1312 = vmatpush.msra.mxu0 %v1298
    %1313 = vmatpush.msra.mxu0 %v1297
    %1314 = vmatpush.msra.mxu0 %v1296
    %1315 = vmatpush.msra.mxu0 %v1295
    %1316 = vmatpush.msra.mxu0 %v1294
    %1317 = vmatpush.msra.mxu0 %v1293
    %1318 = vmatpush.msra.mxu0 %v1292
    %1319 = vmatpush.msra.mxu0 %v1291
    %1320 = vmatpush.msra.mxu0 %v1290
    %1321 = vmatpush.msra.mxu0 %v1289
    %1322 = vmatpush.msra.mxu0 %v1288
    %1323 = vmatpush.msra.mxu0 %v1287
    %1324 = vmatmul.f32.gmra.mxu0 %v1285
    %v1325 = vpop.f32.mrf.mxu0
    %v1326 = vadd.f32 %v1306, %v1325
    %1327 = vdwg.mxu0
    %v1328 = vmax.f32 %v1326, 0.0
    %s1329 = scalar_lea.vmem [#allocation14], 512
    %v1330 = vld [vmem:[%s1329] sm:$0xff]
    %v1331 = vld [vmem:[%s1329 + $0x8] sm:$0xff]
    %v1332 = vld [vmem:[%s1329 + $0x10] sm:$0xff]
    %v1333 = vld [vmem:[%s1329 + $0x18] sm:$0xff]
    %v1334 = vld [vmem:[%s1329 + $0x20] sm:$0xff]
    %v1335 = vld [vmem:[%s1329 + $0x28] sm:$0xff]
    %v1336 = vld [vmem:[%s1329 + $0x30] sm:$0xff]
    %v1337 = vld [vmem:[%s1329 + $0x38] sm:$0xff]
    %v1338 = vld [vmem:[%s1329 + $0x40] sm:$0xff]
    %v1339 = vld [vmem:[%s1329 + $0x48] sm:$0xff]
    %v1340 = vld [vmem:[%s1329 + $0x50] sm:$0xff]
    %v1341 = vld [vmem:[%s1329 + $0x58] sm:$0xff]
    %v1342 = vld [vmem:[%s1329 + $0x60] sm:$0xff]
    %v1343 = vld [vmem:[%s1329 + $0x68] sm:$0xff]
    %v1344 = vld [vmem:[%s1329 + $0x70] sm:$0xff]
    %v1345 = vld [vmem:[%s1329 + $0x78] sm:$0xff]
    %s1346 = scalar_lea.vmem %s8, 4
    %v1347 = vld [vmem:[%s1346] sm:$0x1]
    %v1349 = vperm.slane %v1347, 0
    %1351 = vmatpush.msra.mxu0 %v1345
    %1352 = vmatpush.msra.mxu0 %v1344
    %1353 = vmatpush.msra.mxu0 %v1343
    %1354 = vmatpush.msra.mxu0 %v1342
    %1355 = vmatpush.msra.mxu0 %v1341
    %1356 = vmatpush.msra.mxu0 %v1340
    %1357 = vmatpush.msra.mxu0 %v1339
    %1358 = vmatpush.msra.mxu0 %v1338
    %1359 = vmatpush.msra.mxu0 %v1337
    %1360 = vmatpush.msra.mxu0 %v1336
    %1361 = vmatpush.msra.mxu0 %v1335
    %1362 = vmatpush.msra.mxu0 %v1334
    %1363 = vmatpush.msra.mxu0 %v1333
    %1364 = vmatpush.msra.mxu0 %v1332
    %1365 = vmatpush.msra.mxu0 %v1331
    %1366 = vmatpush.msra.mxu0 %v1330
    %1367 = vmatmul.f32.gmra.mxu0 %v1328
    %v1368 = vpop.f32.mrf.mxu0
    %v1369 = vadd.f32 %v1349, %v1368
    %1370 = vdwg.mxu0
    %v1371 = vmax.f32 %v1369, 0.0
    %s1372 = scalar_lea.vmem [#allocation16], 1024
    %v1373 = vld [vmem:[%s1372] sm:$0xff]
    %v1374 = vld [vmem:[%s1372 + $0x8] sm:$0xff]
    %v1375 = vld [vmem:[%s1372 + $0x10] sm:$0xff]
    %v1376 = vld [vmem:[%s1372 + $0x18] sm:$0xff]
    %v1377 = vld [vmem:[%s1372 + $0x20] sm:$0xff]
    %v1378 = vld [vmem:[%s1372 + $0x28] sm:$0xff]
    %v1379 = vld [vmem:[%s1372 + $0x30] sm:$0xff]
    %v1380 = vld [vmem:[%s1372 + $0x38] sm:$0xff]
    %v1381 = vld [vmem:[%s1372 + $0x40] sm:$0xff]
    %v1382 = vld [vmem:[%s1372 + $0x48] sm:$0xff]
    %v1383 = vld [vmem:[%s1372 + $0x50] sm:$0xff]
    %v1384 = vld [vmem:[%s1372 + $0x58] sm:$0xff]
    %v1385 = vld [vmem:[%s1372 + $0x60] sm:$0xff]
    %v1386 = vld [vmem:[%s1372 + $0x68] sm:$0xff]
    %v1387 = vld [vmem:[%s1372 + $0x70] sm:$0xff]
    %v1388 = vld [vmem:[%s1372 + $0x78] sm:$0xff]
    %v1389 = vld [vmem:[%s1372 + $0x80] sm:$0xff]
    %v1390 = vld [vmem:[%s1372 + $0x88] sm:$0xff]
    %v1391 = vld [vmem:[%s1372 + $0x90] sm:$0xff]
    %v1392 = vld [vmem:[%s1372 + $0x98] sm:$0xff]
    %v1393 = vld [vmem:[%s1372 + $0xa0] sm:$0xff]
    %v1394 = vld [vmem:[%s1372 + $0xa8] sm:$0xff]
    %v1395 = vld [vmem:[%s1372 + $0xb0] sm:$0xff]
    %v1396 = vld [vmem:[%s1372 + $0xb8] sm:$0xff]
    %v1397 = vld [vmem:[%s1372 + $0xc0] sm:$0xff]
    %v1398 = vld [vmem:[%s1372 + $0xc8] sm:$0xff]
    %v1399 = vld [vmem:[%s1372 + $0xd0] sm:$0xff]
    %v1400 = vld [vmem:[%s1372 + $0xd8] sm:$0xff]
    %v1401 = vld [vmem:[%s1372 + $0xe0] sm:$0xff]
    %v1402 = vld [vmem:[%s1372 + $0xe8] sm:$0xff]
    %v1403 = vld [vmem:[%s1372 + $0xf0] sm:$0xff]
    %v1404 = vld [vmem:[%s1372 + $0xf8] sm:$0xff]
    %s1405 = scalar_lea.vmem [#allocation17], 8
    %v1406 = vld [vmem:[%s1405] sm:$0x3]
    %v1408 = vperm.slane %v1406, 0
    %v1409 = vperm.slane %v1406, 1
    %1412 = vmatpush.msra.mxu0 %v1403
    %1413 = vmatpush.msra.mxu0 %v1401
    %1414 = vmatpush.msra.mxu0 %v1399
    %1415 = vmatpush.msra.mxu0 %v1397
    %1416 = vmatpush.msra.mxu0 %v1395
    %1417 = vmatpush.msra.mxu0 %v1393
    %1418 = vmatpush.msra.mxu0 %v1391
    %1419 = vmatpush.msra.mxu0 %v1389
    %1420 = vmatpush.msra.mxu0 %v1387
    %1421 = vmatpush.msra.mxu0 %v1385
    %1422 = vmatpush.msra.mxu0 %v1383
    %1423 = vmatpush.msra.mxu0 %v1381
    %1424 = vmatpush.msra.mxu0 %v1379
    %1425 = vmatpush.msra.mxu0 %v1377
    %1426 = vmatpush.msra.mxu0 %v1375
    %1427 = vmatpush.msra.mxu0 %v1373
    %1428 = vmatmul.f32.gmra.mxu0 %v1371
    %v1429 = vpop.f32.mrf.mxu0
    %v1430 = vadd.f32 %v1408, %v1429
    %1431 = vdwg.mxu0
    %1432 = vmatpush.msra.mxu0 %v1404
    %1433 = vmatpush.msra.mxu0 %v1402
    %1434 = vmatpush.msra.mxu0 %v1400
    %1435 = vmatpush.msra.mxu0 %v1398
    %1436 = vmatpush.msra.mxu0 %v1396
    %1437 = vmatpush.msra.mxu0 %v1394
    %1438 = vmatpush.msra.mxu0 %v1392
    %1439 = vmatpush.msra.mxu0 %v1390
    %1440 = vmatpush.msra.mxu0 %v1388
    %1441 = vmatpush.msra.mxu0 %v1386
    %1442 = vmatpush.msra.mxu0 %v1384
    %1443 = vmatpush.msra.mxu0 %v1382
    %1444 = vmatpush.msra.mxu0 %v1380
    %1445 = vmatpush.msra.mxu0 %v1378
    %1446 = vmatpush.msra.mxu0 %v1376
    %1447 = vmatpush.msra.mxu0 %v1374
    %1448 = vmatmul.f32.gmra.mxu0 %v1371
    %v1449 = vpop.f32.mrf.mxu0
    %v1450 = vadd.f32 %v1409, %v1449
    %1451 = vdwg.mxu0
    %v1452 = vsub.f32 %v1198, %v1430
    %v1453 = vadd.f32 %v1199, %v1450
    %s1454 = scalar_lea.vmem [#allocation5], 640
    %v1455 = vld [vmem:[%s1454] sm:$0xff]
    %v1456 = vld [vmem:[%s1454 + $0x8] sm:$0xff]
    %v1457 = vld [vmem:[%s1454 + $0x10] sm:$0xff]
    %v1458 = vld [vmem:[%s1454 + $0x18] sm:$0xff]
    %v1459 = vld [vmem:[%s1454 + $0x20] sm:$0xff]
    %v1460 = vld [vmem:[%s1454 + $0x28] sm:$0xff]
    %v1461 = vld [vmem:[%s1454 + $0x30] sm:$0xff]
    %v1462 = vld [vmem:[%s1454 + $0x38] sm:$0xff]
    %v1463 = vld [vmem:[%s1454 + $0x40] sm:$0xff]
    %v1464 = vld [vmem:[%s1454 + $0x48] sm:$0xff]
    %v1465 = vld [vmem:[%s1454 + $0x50] sm:$0xff]
    %v1466 = vld [vmem:[%s1454 + $0x58] sm:$0xff]
    %v1467 = vld [vmem:[%s1454 + $0x60] sm:$0xff]
    %v1468 = vld [vmem:[%s1454 + $0x68] sm:$0xff]
    %v1469 = vld [vmem:[%s1454 + $0x70] sm:$0xff]
    %v1470 = vld [vmem:[%s1454 + $0x78] sm:$0xff]
    %s1471 = scalar_lea.vmem [#allocation7], 5
    %v1472 = vld [vmem:[%s1471] sm:$0x1]
    %v1474 = vperm.slane %v1472, 0
    %1476 = vmatpush.msra.mxu0 %v1470
    %1477 = vmatpush.msra.mxu0 %v1469
    %1478 = vmatpush.msra.mxu0 %v1468
    %1479 = vmatpush.msra.mxu0 %v1467
    %1480 = vmatpush.msra.mxu0 %v1466
    %1481 = vmatpush.msra.mxu0 %v1465
    %1482 = vmatpush.msra.mxu0 %v1464
    %1483 = vmatpush.msra.mxu0 %v1463
    %1484 = vmatpush.msra.mxu0 %v1462
    %1485 = vmatpush.msra.mxu0 %v1461
    %1486 = vmatpush.msra.mxu0 %v1460
    %1487 = vmatpush.msra.mxu0 %v1459
    %1488 = vmatpush.msra.mxu0 %v1458
    %1489 = vmatpush.msra.mxu0 %v1457
    %1490 = vmatpush.msra.mxu0 %v1456
    %1491 = vmatpush.msra.mxu0 %v1455
    %1492 = vmatmul.f32.gmra.mxu0 %v1452
    %v1493 = vpop.f32.mrf.mxu0
    %v1494 = vadd.f32 %v1474, %v1493
    %1495 = vdwg.mxu0
    %v1496 = vmax.f32 %v1494, 0.0
    %s1497 = scalar_lea.vmem [#allocation8], 640
    %v1498 = vld [vmem:[%s1497] sm:$0xff]
    %v1499 = vld [vmem:[%s1497 + $0x8] sm:$0xff]
    %v1500 = vld [vmem:[%s1497 + $0x10] sm:$0xff]
    %v1501 = vld [vmem:[%s1497 + $0x18] sm:$0xff]
    %v1502 = vld [vmem:[%s1497 + $0x20] sm:$0xff]
    %v1503 = vld [vmem:[%s1497 + $0x28] sm:$0xff]
    %v1504 = vld [vmem:[%s1497 + $0x30] sm:$0xff]
    %v1505 = vld [vmem:[%s1497 + $0x38] sm:$0xff]
    %v1506 = vld [vmem:[%s1497 + $0x40] sm:$0xff]
    %v1507 = vld [vmem:[%s1497 + $0x48] sm:$0xff]
    %v1508 = vld [vmem:[%s1497 + $0x50] sm:$0xff]
    %v1509 = vld [vmem:[%s1497 + $0x58] sm:$0xff]
    %v1510 = vld [vmem:[%s1497 + $0x60] sm:$0xff]
    %v1511 = vld [vmem:[%s1497 + $0x68] sm:$0xff]
    %v1512 = vld [vmem:[%s1497 + $0x70] sm:$0xff]
    %v1513 = vld [vmem:[%s1497 + $0x78] sm:$0xff]
    %s1514 = scalar_lea.vmem [#allocation10], 5
    %v1515 = vld [vmem:[%s1514] sm:$0x1]
    %v1517 = vperm.slane %v1515, 0
    %1519 = vmatpush.msra.mxu0 %v1513
    %1520 = vmatpush.msra.mxu0 %v1512
    %1521 = vmatpush.msra.mxu0 %v1511
    %1522 = vmatpush.msra.mxu0 %v1510
    %1523 = vmatpush.msra.mxu0 %v1509
    %1524 = vmatpush.msra.mxu0 %v1508
    %1525 = vmatpush.msra.mxu0 %v1507
    %1526 = vmatpush.msra.mxu0 %v1506
    %1527 = vmatpush.msra.mxu0 %v1505
    %1528 = vmatpush.msra.mxu0 %v1504
    %1529 = vmatpush.msra.mxu0 %v1503
    %1530 = vmatpush.msra.mxu0 %v1502
    %1531 = vmatpush.msra.mxu0 %v1501
    %1532 = vmatpush.msra.mxu0 %v1500
    %1533 = vmatpush.msra.mxu0 %v1499
    %1534 = vmatpush.msra.mxu0 %v1498
    %1535 = vmatmul.f32.gmra.mxu0 %v1496
    %v1536 = vpop.f32.mrf.mxu0
    %v1537 = vadd.f32 %v1517, %v1536
    %1538 = vdwg.mxu0
    %v1539 = vmax.f32 %v1537, 0.0
    %s1540 = scalar_lea.vmem [#allocation11], 640
    %v1541 = vld [vmem:[%s1540] sm:$0xff]
    %v1542 = vld [vmem:[%s1540 + $0x8] sm:$0xff]
    %v1543 = vld [vmem:[%s1540 + $0x10] sm:$0xff]
    %v1544 = vld [vmem:[%s1540 + $0x18] sm:$0xff]
    %v1545 = vld [vmem:[%s1540 + $0x20] sm:$0xff]
    %v1546 = vld [vmem:[%s1540 + $0x28] sm:$0xff]
    %v1547 = vld [vmem:[%s1540 + $0x30] sm:$0xff]
    %v1548 = vld [vmem:[%s1540 + $0x38] sm:$0xff]
    %v1549 = vld [vmem:[%s1540 + $0x40] sm:$0xff]
    %v1550 = vld [vmem:[%s1540 + $0x48] sm:$0xff]
    %v1551 = vld [vmem:[%s1540 + $0x50] sm:$0xff]
    %v1552 = vld [vmem:[%s1540 + $0x58] sm:$0xff]
    %v1553 = vld [vmem:[%s1540 + $0x60] sm:$0xff]
    %v1554 = vld [vmem:[%s1540 + $0x68] sm:$0xff]
    %v1555 = vld [vmem:[%s1540 + $0x70] sm:$0xff]
    %v1556 = vld [vmem:[%s1540 + $0x78] sm:$0xff]
    %s1557 = scalar_lea.vmem [#allocation13], 5
    %v1558 = vld [vmem:[%s1557] sm:$0x1]
    %v1560 = vperm.slane %v1558, 0
    %1562 = vmatpush.msra.mxu0 %v1556
    %1563 = vmatpush.msra.mxu0 %v1555
    %1564 = vmatpush.msra.mxu0 %v1554
    %1565 = vmatpush.msra.mxu0 %v1553
    %1566 = vmatpush.msra.mxu0 %v1552
    %1567 = vmatpush.msra.mxu0 %v1551
    %1568 = vmatpush.msra.mxu0 %v1550
    %1569 = vmatpush.msra.mxu0 %v1549
    %1570 = vmatpush.msra.mxu0 %v1548
    %1571 = vmatpush.msra.mxu0 %v1547
    %1572 = vmatpush.msra.mxu0 %v1546
    %1573 = vmatpush.msra.mxu0 %v1545
    %1574 = vmatpush.msra.mxu0 %v1544
    %1575 = vmatpush.msra.mxu0 %v1543
    %1576 = vmatpush.msra.mxu0 %v1542
    %1577 = vmatpush.msra.mxu0 %v1541
    %1578 = vmatmul.f32.gmra.mxu0 %v1539
    %v1579 = vpop.f32.mrf.mxu0
    %v1580 = vadd.f32 %v1560, %v1579
    %1581 = vdwg.mxu0
    %v1582 = vmax.f32 %v1580, 0.0
    %s1583 = scalar_lea.vmem [#allocation14], 640
    %v1584 = vld [vmem:[%s1583] sm:$0xff]
    %v1585 = vld [vmem:[%s1583 + $0x8] sm:$0xff]
    %v1586 = vld [vmem:[%s1583 + $0x10] sm:$0xff]
    %v1587 = vld [vmem:[%s1583 + $0x18] sm:$0xff]
    %v1588 = vld [vmem:[%s1583 + $0x20] sm:$0xff]
    %v1589 = vld [vmem:[%s1583 + $0x28] sm:$0xff]
    %v1590 = vld [vmem:[%s1583 + $0x30] sm:$0xff]
    %v1591 = vld [vmem:[%s1583 + $0x38] sm:$0xff]
    %v1592 = vld [vmem:[%s1583 + $0x40] sm:$0xff]
    %v1593 = vld [vmem:[%s1583 + $0x48] sm:$0xff]
    %v1594 = vld [vmem:[%s1583 + $0x50] sm:$0xff]
    %v1595 = vld [vmem:[%s1583 + $0x58] sm:$0xff]
    %v1596 = vld [vmem:[%s1583 + $0x60] sm:$0xff]
    %v1597 = vld [vmem:[%s1583 + $0x68] sm:$0xff]
    %v1598 = vld [vmem:[%s1583 + $0x70] sm:$0xff]
    %v1599 = vld [vmem:[%s1583 + $0x78] sm:$0xff]
    %s1600 = scalar_lea.vmem %s8, 5
    %v1601 = vld [vmem:[%s1600] sm:$0x1]
    %v1603 = vperm.slane %v1601, 0
    %1605 = vmatpush.msra.mxu0 %v1599
    %1606 = vmatpush.msra.mxu0 %v1598
    %1607 = vmatpush.msra.mxu0 %v1597
    %1608 = vmatpush.msra.mxu0 %v1596
    %1609 = vmatpush.msra.mxu0 %v1595
    %1610 = vmatpush.msra.mxu0 %v1594
    %1611 = vmatpush.msra.mxu0 %v1593
    %1612 = vmatpush.msra.mxu0 %v1592
    %1613 = vmatpush.msra.mxu0 %v1591
    %1614 = vmatpush.msra.mxu0 %v1590
    %1615 = vmatpush.msra.mxu0 %v1589
    %1616 = vmatpush.msra.mxu0 %v1588
    %1617 = vmatpush.msra.mxu0 %v1587
    %1618 = vmatpush.msra.mxu0 %v1586
    %1619 = vmatpush.msra.mxu0 %v1585
    %1620 = vmatpush.msra.mxu0 %v1584
    %1621 = vmatmul.f32.gmra.mxu0 %v1582
    %v1622 = vpop.f32.mrf.mxu0
    %v1623 = vadd.f32 %v1603, %v1622
    %1624 = vdwg.mxu0
    %v1625 = vmax.f32 %v1623, 0.0
    %s1626 = scalar_lea.vmem [#allocation16], 1280
    %v1627 = vld [vmem:[%s1626 + $0x8] sm:$0xff]
    %v1628 = vld [vmem:[%s1626 + $0x18] sm:$0xff]
    %v1629 = vld [vmem:[%s1626 + $0x28] sm:$0xff]
    %v1630 = vld [vmem:[%s1626 + $0x38] sm:$0xff]
    %v1631 = vld [vmem:[%s1626 + $0x48] sm:$0xff]
    %v1632 = vld [vmem:[%s1626 + $0x58] sm:$0xff]
    %v1633 = vld [vmem:[%s1626 + $0x68] sm:$0xff]
    %v1634 = vld [vmem:[%s1626 + $0x78] sm:$0xff]
    %v1635 = vld [vmem:[%s1626 + $0x88] sm:$0xff]
    %v1636 = vld [vmem:[%s1626 + $0x98] sm:$0xff]
    %v1637 = vld [vmem:[%s1626 + $0xa8] sm:$0xff]
    %v1638 = vld [vmem:[%s1626 + $0xb8] sm:$0xff]
    %v1639 = vld [vmem:[%s1626 + $0xc8] sm:$0xff]
    %v1640 = vld [vmem:[%s1626 + $0xd8] sm:$0xff]
    %v1641 = vld [vmem:[%s1626 + $0xe8] sm:$0xff]
    %v1642 = vld [vmem:[%s1626 + $0xf8] sm:$0xff]
    %s1643 = scalar_lea.vmem [#allocation17], 10
    %v1644 = vld [vmem:[%s1643] sm:$0x3]
    %v1646 = vperm.slane %v1644, 1
    %1648 = vmatpush.msra.mxu0 %v1642
    %1649 = vmatpush.msra.mxu0 %v1641
    %1650 = vmatpush.msra.mxu0 %v1640
    %1651 = vmatpush.msra.mxu0 %v1639
    %1652 = vmatpush.msra.mxu0 %v1638
    %1653 = vmatpush.msra.mxu0 %v1637
    %1654 = vmatpush.msra.mxu0 %v1636
    %1655 = vmatpush.msra.mxu0 %v1635
    %1656 = vmatpush.msra.mxu0 %v1634
    %1657 = vmatpush.msra.mxu0 %v1633
    %1658 = vmatpush.msra.mxu0 %v1632
    %1659 = vmatpush.msra.mxu0 %v1631
    %1660 = vmatpush.msra.mxu0 %v1630
    %1661 = vmatpush.msra.mxu0 %v1629
    %1662 = vmatpush.msra.mxu0 %v1628
    %1663 = vmatpush.msra.mxu0 %v1627
    %1664 = vmatmul.f32.gmra.mxu0 %v1625
    %v1665 = vpop.f32.mrf.mxu0
    %v1666 = vadd.f32 %v1646, %v1665
    %1667 = vdwg.mxu0
    %v1668 = vadd.f32 %v1453, %v1666
    %1669 = vst [vmem:[#allocation19] sm:$0xff] %v1668
    // Predicated region
    $region86: #{tpu_custom_call.1} parent=1 // pred_check
      _
    $region87: #{tpu_custom_call.1} parent=1 // pred_check_branch
      %1671 = sbr.rel (0) target = $region89
    $region88: #{tpu_custom_call.1} parent=1 // pred_region
      %1673 = vsyncadd [#allocation4], 0
      %s1675 = sshll.u32 [#allocation19], 4
      %s1676 = int_to_ptr.vmem [resolvable:$true] %s1675
      %s1677 = sshll.u32 %s11, 4
      %s1678 = int_to_ptr.hbm [resolvable:$true] %s1677
      %1680 = dma.vmem_to_hbm [thread:$0]  %s1676, 128, %s1678, [#allocation4]
    $region89: #{tpu_custom_call.1} parent=1 // pred_fallthru
      _
    // Predicated region
    $region90: #{tpu_custom_call.1} parent=1 // pred_check
      _
    $region91: #{tpu_custom_call.1} parent=1 // pred_check_branch
      %1682 = sbr.rel (0) target = $region93
    $region92: #{tpu_custom_call.1} parent=1 // pred_region
      %1684 = dma.done [#allocation4], 128
    $region93: #{tpu_custom_call.1} parent=1 // pred_fallthru
      _
    %1685 = vsyncpa [#allocation3], 1
    %1686 = vsyncpa [#allocation6], 1
    %1687 = vsyncpa [#allocation9], 1
    %1688 = vsyncpa [#allocation12], 1
    %1689 = vsyncpa [#allocation15], 1
    %1690 = vsyncpa [#allocation18], 1
    %1691 = vsyncpa [#allocation4], 1

</llo_original>
